<compile_context>
chip_gen: v7x
topology: tpu7x:2x2x1
jax: 0.10.0
libtpu: 0.0.40
codegen_flags: <defaults>
</compile_context>

<pallas_src>
import functools

import numpy as np
import jax
import jax.numpy as jnp
from jax import lax
from jax.experimental import pallas as pl
from jax.experimental.pallas import tpu as pltpu


# ----------------------------- Pallas kernel --------------------------------
def _conv_bn_relu_kernel(x_ref, w_ref, b_ref, o_ref, patch_ref, *,
                         kh, kw, dilation, boh, ow, c, apply_relu):
    """One grid step == one (image, output-row band).  stride == 1.

    x_ref    : (1, HP, WP, C)   bf16  padded NHWC image (resident across bands)
    w_ref    : (OC, K)          bf16  BN-scale-folded weight, K = KH*KW*C
    b_ref    : (OC, 1)          f32   BN shift (+ folded conv bias)
    o_ref    : (1, OC, TILE_M)        lane-dense, unpadded output band
    patch_ref: (TILE_M, K)      bf16  VMEM im2col patch scratch for the band
    """
    m = pl.program_id(1)
    tile_m = boh * ow
    h_base = m * boh
    if boh % 8 == 0:
        h_base = pl.multiple_of(h_base, 8)

    # Build the (TILE_M, K) im2col patch once (K on lanes, taps side by side).
    for i in range(kh):
        for j in range(kw):
            win = x_ref[0, pl.ds(h_base + i * dilation, boh),
                        pl.ds(j * dilation, ow), :]            # (BOH, OW, C)
            t = i * kw + j
            patch_ref[:, t * c:(t + 1) * c] = win.reshape(tile_m, c)

    # ONE deep-K MXU matmul; the result lands directly in (OC, TILE_M)
    # orientation so the store is lane-dense with zero channel padding.
    acc = jnp.einsum("ok,mk->om", w_ref[...], patch_ref[...],
                     preferred_element_type=jnp.float32)       # (OC, TILE_M)

    y = acc + b_ref[...]
    if apply_relu:
        y = jnp.maximum(y, 0.0)
    o_ref[0] = y.astype(o_ref.dtype)


# ------------------------------ module wrapper -------------------------------
class BasicConvPallas:
    """JAX/Pallas equivalent of BasicConv (groups=1, stride=1)."""

    def __init__(self, in_planes, out_planes, kernel_size, stride=1, padding=0,
                 dilation=1, groups=1, relu=True, bn=True, bias=False,
                 band_rows=None, out_dtype=jnp.float32,
                 key=jax.random.PRNGKey(0)):
        assert groups == 1, "only groups=1 implemented"
        self.in_planes = in_planes
        self.out_planes = out_planes
        self.kh = self.kw = kernel_size
        self.stride = stride
        self.padding = padding
        self.dilation = dilation
        self.relu = relu
        self.bn = bn
        self.use_bias = bias
        self.band_rows = band_rows
        # out_dtype=jnp.bfloat16 halves HBM writeback if the consumer accepts
        # it; default f32 matches the PyTorch module's output dtype.
        self.out_dtype = out_dtype

        k_w, k_b, k_g, k_be, k_m, k_v = jax.random.split(key, 6)
        fan_in = in_planes * kernel_size * kernel_size
        bound = 1.0 / (fan_in ** 0.5)
        # Conv weight: [OC, C, KH, KW] (PyTorch layout), deterministic init.
        self.weight = jax.random.uniform(
            k_w, (out_planes, in_planes, kernel_size, kernel_size),
            minval=-bound, maxval=bound, dtype=jnp.float32)
        self.conv_bias = (jax.random.uniform(
            k_b, (out_planes,), minval=-bound, maxval=bound, dtype=jnp.float32)
            if bias else jnp.zeros((out_planes,), jnp.float32))

        if bn:
            self.gamma = 1.0 + 0.1 * jax.random.normal(k_g, (out_planes,), jnp.float32)
            self.beta = 0.1 * jax.random.normal(k_be, (out_planes,), jnp.float32)
            self.running_mean = 0.1 * jax.random.normal(k_m, (out_planes,), jnp.float32)
            self.running_var = jnp.abs(jax.random.normal(k_v, (out_planes,), jnp.float32)) + 0.5
        else:
            self.gamma = self.beta = self.running_mean = self.running_var = None
        self.eps = 1e-5

    def _bn_fold(self):
        if self.bn:
            scale = self.gamma / jnp.sqrt(self.running_var + self.eps)
            shift = self.beta - self.running_mean * scale
        else:
            scale = jnp.ones((self.out_planes,), jnp.float32)
            shift = jnp.zeros((self.out_planes,), jnp.float32)
        # (x@W + cb)*s + t = x@(W*s) + (cb*s + t)
        shift = shift + self.conv_bias * scale
        return scale, shift

    @staticmethod
    def _pick_band_rows(oh, ow):
        # Output band rows: TILE_M = band*OW must be a multiple of 128 (lane-
        # dense stores) or cover the whole image (full-extent block).
        cands = [b for b in range(1, oh + 1)
                 if oh % b == 0 and (b * ow) % 128 == 0]
        if not cands:
            return oh
        return min(cands, key=lambda b: abs(b * ow - 384))

    def __call__(self, x):
        n, c, h, w = x.shape
        assert c == self.in_planes
        if self.stride != 1:
            # TODO(synk): stride > 1 path (strided window gather) not implemented.
            raise NotImplementedError("only stride == 1 implemented")
        kh, kw = self.kh, self.kw
        pad, dil = self.padding, self.dilation
        oh = h + 2 * pad - dil * (kh - 1)
        ow = w + 2 * pad - dil * (kw - 1)
        oc = self.out_planes
        k = kh * kw * c

        boh = self.band_rows if self.band_rows is not None else self._pick_band_rows(oh, ow)
        assert oh % boh == 0 and ((boh * ow) % 128 == 0 or boh == oh), \
            "band_rows must evenly tile OH and give a lane-dense TILE_M"
        tile_m = boh * ow
        n_m = oh // boh

        scale, shift = self._bn_fold()

        # Weight: [OC, C, KH, KW] -> [OC, K] with K ordered (i, j, c), BN scale
        # folded in, bf16 for the MXU.
        w2 = jnp.transpose(self.weight, (0, 2, 3, 1)).reshape(oc, k)
        w2 = (w2 * scale[:, None]).astype(jnp.bfloat16)
        shift2 = shift.reshape(oc, 1).astype(jnp.float32)

        # NCHW -> NHWC, spatial zero pad, bf16 (XLA fuses into one pass).
        # TODO(synk): an NHWC module boundary / in-kernel masked halo loads
        #             would remove this remaining input pass entirely.
        x_bf = jnp.pad(jnp.transpose(x, (0, 2, 3, 1)),
                       ((0, 0), (pad, pad), (pad, pad), (0, 0))).astype(jnp.bfloat16)
        hp, wp = h + 2 * pad, w + 2 * pad

        kernel = functools.partial(
            _conv_bn_relu_kernel, kh=kh, kw=kw, dilation=dil,
            boh=boh, ow=ow, c=c, apply_relu=self.relu)

        out_bytes = n * oh * ow * oc * np.dtype(self.out_dtype).itemsize
        flops = 2 * n * oh * ow * k * oc
        bytes_accessed = x_bf.size * 2 + w2.size * 2 + shift2.size * 4 + out_bytes

        try:
            vmem_limit = min(
                int(pltpu.get_tpu_info().vmem_capacity_bytes * 3 // 4), 96 << 20)
        except Exception:
            vmem_limit = 48 << 20      # safe on v5e/v6e (128 MiB) and v7x (64 MiB)

        out = pl.pallas_call(
            kernel,
            out_shape=jax.ShapeDtypeStruct((n, oc, oh * ow), self.out_dtype),
            grid_spec=pltpu.PrefetchScalarGridSpec(
                num_scalar_prefetch=0,
                grid=(n, n_m),
                in_specs=[
                    # whole padded image; block index constant across the band
                    # axis so it is DMA'd once per image.
                    pl.BlockSpec((1, hp, wp, c), lambda b, m: (b, 0, 0, 0)),
                    # constant weight / shift blocks: single-buffered.
                    pl.BlockSpec((oc, k), lambda b, m: (0, 0),
                                 pipeline_mode=pl.Buffered(1)),
                    pl.BlockSpec((oc, 1), lambda b, m: (0, 0),
                                 pipeline_mode=pl.Buffered(1)),
                ],
                out_specs=pl.BlockSpec((1, oc, tile_m), lambda b, m: (b, 0, m)),
                scratch_shapes=[pltpu.VMEM((tile_m, k), jnp.bfloat16)],
            ),
            compiler_params=pltpu.CompilerParams(
                dimension_semantics=("parallel", "parallel"),
                vmem_limit_bytes=vmem_limit,
            ),
            cost_estimate=pl.CostEstimate(
                flops=flops, transcendentals=0, bytes_accessed=bytes_accessed),
        )(x_bf, w2, shift2)

        # (N, OC, OH*OW) -> NCHW with a free reshape: no transpose, no slice.
        return out.reshape(n, oc, oh, ow)


# ------------------------------- references ----------------------------------
def _reference_bf16(module, x):
    """Mirrors the kernel's bf16 operands exactly (tight tolerance)."""
    scale, shift = module._bn_fold()
    w_scaled = (module.weight * scale[:, None, None, None]).astype(jnp.bfloat16)
    out = lax.conv_general_dilated(
        x.astype(jnp.bfloat16), w_scaled,
        window_strides=(module.stride, module.stride),
        padding=[(module.padding, module.padding)] * 2,
        rhs_dilation=(module.dilation, module.dilation),
        dimension_numbers=("NCHW", "OIHW", "NCHW"),
        preferred_element_type=jnp.float32)
    out = out + shift.reshape(1, -1, 1, 1)
    if module.relu:
        out = jnp.maximum(out, 0.0)
    return out


def _reference_f32(module, x):
    """Full-precision semantic reference (looser tolerance vs bf16 kernel)."""
    out = lax.conv_general_dilated(
        x, module.weight,
        window_strides=(module.stride, module.stride),
        padding=[(module.padding, module.padding)] * 2,
        rhs_dilation=(module.dilation, module.dilation),
        dimension_numbers=("NCHW", "OIHW", "NCHW"))
    out = out + module.conv_bias.reshape(1, -1, 1, 1)
    if module.bn:
        scale = module.gamma / jnp.sqrt(module.running_var + module.eps)
        shift = module.beta - module.running_mean * scale
        out = out * scale.reshape(1, -1, 1, 1) + shift.reshape(1, -1, 1, 1)
    if module.relu:
        out = jnp.maximum(out, 0.0)
    return out


if __name__ == "__main__":
    key = jax.random.PRNGKey(0)
    k_x, k_p, k_p2 = jax.random.split(key, 3)

    x = jax.random.normal(k_x, (2, 4, 16, 16), dtype=jnp.float32)

    # Case 1: 3x3 conv, pad=1, BN + ReLU (the common BasicConv configuration).
    m1 = BasicConvPallas(in_planes=4, out_planes=8, kernel_size=3, stride=1,
                         padding=1, relu=True, bn=True, bias=False, key=k_p)
    out1 = jax.block_until_ready(m1(x))
    assert out1.shape == (2, 8, 16, 16)
    ref1_bf = jax.block_until_ready(_reference_bf16(m1, x))
    ref1_f32 = jax.block_until_ready(_reference_f32(m1, x))
    assert jnp.allclose(out1, ref1_bf, atol=1e-3, rtol=1e-3), \
        "case1: mismatch vs bf16-matched reference"
    assert jnp.allclose(out1, ref1_f32, atol=5e-2, rtol=5e-2), \
        "case1: mismatch vs f32 reference"

    # Case 2: same weights, forced 2 output-row bands -> exercises the
    # M-tiling / band-offset path with a 4-step fully-parallel grid.
    m1b = BasicConvPallas(in_planes=4, out_planes=8, kernel_size=3, stride=1,
                          padding=1, relu=True, bn=True, bias=False,
                          band_rows=8, key=k_p)
    out1b = jax.block_until_ready(m1b(x))
    assert jnp.allclose(out1b, ref1_bf, atol=1e-3, rtol=1e-3), \
        "case2: banded kernel mismatch vs bf16-matched reference"

    # Case 3: 1x1 conv with conv bias, no BN, no ReLU.
    m2 = BasicConvPallas(in_planes=4, out_planes=8, kernel_size=1, stride=1,
                         padding=0, relu=False, bn=False, bias=True, key=k_p2)
    out2 = jax.block_until_ready(m2(x))
    assert out2.shape == (2, 8, 16, 16)
    assert jnp.allclose(out2, _reference_bf16(m2, x), atol=1e-3, rtol=1e-3), \
        "case3: mismatch vs bf16-matched reference"
    assert jnp.allclose(out2, _reference_f32(m2, x), atol=5e-2, rtol=5e-2), \
        "case3: mismatch vs f32 reference"

    print("KERNEL_OK")
</pallas_src>

<mosaic_0001>
module attributes {stable_mosaic.version = 11 : i64} {
  func.func @_conv_bn_relu_kernel(%arg0: i32, %arg1: i32, %arg2: memref<1x18x18x4xbf16, #tpu.memory_space<vmem>>, %arg3: memref<8x36xbf16, #tpu.memory_space<vmem>>, %arg4: memref<8x1xf32, #tpu.memory_space<vmem>>, %arg5: memref<1x8x256xf32, #tpu.memory_space<vmem>>, %arg6: memref<256x36xbf16, #tpu.memory_space<vmem>>) attributes {dimension_semantics = [#tpu.dimension_semantics<parallel>, #tpu.dimension_semantics<parallel>], iteration_bounds = array<i64: 2, 1>, scalar_prefetch = 0 : i64, scratch_operands = 1 : i64, tpu.core_type = #tpu.core_type<tc>, window_params = [{transform_indices = @transform_0, window_bounds = array<i64: 1, 18, 18, 4>}, {pipeline_mode = #tpu.pipeline_mode<synchronous>, transform_indices = @transform_1, window_bounds = array<i64: 8, 36>}, {pipeline_mode = #tpu.pipeline_mode<synchronous>, transform_indices = @transform_2, window_bounds = array<i64: 8, 1>}, {transform_indices = @transform_3, window_bounds = array<i64: 1, 8, 256>}]} {
    %c16_i32 = arith.constant 16 : i32
    %0 = arith.muli %arg1, %c16_i32 : i32
    %1 = tpu.assume_multiple %0, 8 : i32
    %c0_i32 = arith.constant 0 : i32
    %2 = arith.addi %1, %c0_i32 : i32
    %c0 = arith.constant 0 : index
    %3 = arith.index_cast %2 : i32 to index
    %c0_0 = arith.constant 0 : index
    %c0_1 = arith.constant 0 : index
    %4 = vector.load %arg2[%c0, %3, %c0_0, %c0_1] : memref<1x18x18x4xbf16, #tpu.memory_space<vmem>>, vector<1x16x16x4xbf16>
    %5 = vector.shape_cast %4 : vector<1x16x16x4xbf16> to vector<16x16x4xbf16>
    %6 = vector.shape_cast %5 : vector<16x16x4xbf16> to vector<256x4xbf16>
    %c0_2 = arith.constant 0 : index
    %c0_3 = arith.constant 0 : index
    %7 = vector.load %arg6[%c0_2, %c0_3] : memref<256x36xbf16, #tpu.memory_space<vmem>>, vector<256x4xbf16>
    tpu.vector_store %arg6[%c0_2, %c0_3], %6 {strides = array<i32>} : memref<256x36xbf16, #tpu.memory_space<vmem>>, vector<256x4xbf16>,
    %c0_i32_4 = arith.constant 0 : i32
    %8 = arith.addi %1, %c0_i32_4 : i32
    %c0_5 = arith.constant 0 : index
    %9 = arith.index_cast %8 : i32 to index
    %c1 = arith.constant 1 : index
    %c0_6 = arith.constant 0 : index
    %10 = vector.load %arg2[%c0_5, %9, %c1, %c0_6] : memref<1x18x18x4xbf16, #tpu.memory_space<vmem>>, vector<1x16x16x4xbf16>
    %11 = vector.shape_cast %10 : vector<1x16x16x4xbf16> to vector<16x16x4xbf16>
    %12 = vector.shape_cast %11 : vector<16x16x4xbf16> to vector<256x4xbf16>
    %c0_7 = arith.constant 0 : index
    %c4 = arith.constant 4 : index
    %13 = vector.load %arg6[%c0_7, %c4] : memref<256x36xbf16, #tpu.memory_space<vmem>>, vector<256x4xbf16>
    tpu.vector_store %arg6[%c0_7, %c4], %12 {strides = array<i32>} : memref<256x36xbf16, #tpu.memory_space<vmem>>, vector<256x4xbf16>,
    %c0_i32_8 = arith.constant 0 : i32
    %14 = arith.addi %1, %c0_i32_8 : i32
    %c0_9 = arith.constant 0 : index
    %15 = arith.index_cast %14 : i32 to index
    %c2 = arith.constant 2 : index
    %c0_10 = arith.constant 0 : index
    %16 = vector.load %arg2[%c0_9, %15, %c2, %c0_10] : memref<1x18x18x4xbf16, #tpu.memory_space<vmem>>, vector<1x16x16x4xbf16>
    %17 = vector.shape_cast %16 : vector<1x16x16x4xbf16> to vector<16x16x4xbf16>
    %18 = vector.shape_cast %17 : vector<16x16x4xbf16> to vector<256x4xbf16>
    %c0_11 = arith.constant 0 : index
    %c8 = arith.constant 8 : index
    %19 = vector.load %arg6[%c0_11, %c8] : memref<256x36xbf16, #tpu.memory_space<vmem>>, vector<256x4xbf16>
    tpu.vector_store %arg6[%c0_11, %c8], %18 {strides = array<i32>} : memref<256x36xbf16, #tpu.memory_space<vmem>>, vector<256x4xbf16>,
    %c1_i32 = arith.constant 1 : i32
    %20 = arith.addi %1, %c1_i32 : i32
    %c0_12 = arith.constant 0 : index
    %21 = arith.index_cast %20 : i32 to index
    %c0_13 = arith.constant 0 : index
    %c0_14 = arith.constant 0 : index
    %22 = vector.load %arg2[%c0_12, %21, %c0_13, %c0_14] : memref<1x18x18x4xbf16, #tpu.memory_space<vmem>>, vector<1x16x16x4xbf16>
    %23 = vector.shape_cast %22 : vector<1x16x16x4xbf16> to vector<16x16x4xbf16>
    %24 = vector.shape_cast %23 : vector<16x16x4xbf16> to vector<256x4xbf16>
    %c0_15 = arith.constant 0 : index
    %c12 = arith.constant 12 : index
    %25 = vector.load %arg6[%c0_15, %c12] : memref<256x36xbf16, #tpu.memory_space<vmem>>, vector<256x4xbf16>
    tpu.vector_store %arg6[%c0_15, %c12], %24 {strides = array<i32>} : memref<256x36xbf16, #tpu.memory_space<vmem>>, vector<256x4xbf16>,
    %c1_i32_16 = arith.constant 1 : i32
    %26 = arith.addi %1, %c1_i32_16 : i32
    %c0_17 = arith.constant 0 : index
    %27 = arith.index_cast %26 : i32 to index
    %c1_18 = arith.constant 1 : index
    %c0_19 = arith.constant 0 : index
    %28 = vector.load %arg2[%c0_17, %27, %c1_18, %c0_19] : memref<1x18x18x4xbf16, #tpu.memory_space<vmem>>, vector<1x16x16x4xbf16>
    %29 = vector.shape_cast %28 : vector<1x16x16x4xbf16> to vector<16x16x4xbf16>
    %30 = vector.shape_cast %29 : vector<16x16x4xbf16> to vector<256x4xbf16>
    %c0_20 = arith.constant 0 : index
    %c16 = arith.constant 16 : index
    %31 = vector.load %arg6[%c0_20, %c16] : memref<256x36xbf16, #tpu.memory_space<vmem>>, vector<256x4xbf16>
    tpu.vector_store %arg6[%c0_20, %c16], %30 {strides = array<i32>} : memref<256x36xbf16, #tpu.memory_space<vmem>>, vector<256x4xbf16>,
    %c1_i32_21 = arith.constant 1 : i32
    %32 = arith.addi %1, %c1_i32_21 : i32
    %c0_22 = arith.constant 0 : index
    %33 = arith.index_cast %32 : i32 to index
    %c2_23 = arith.constant 2 : index
    %c0_24 = arith.constant 0 : index
    %34 = vector.load %arg2[%c0_22, %33, %c2_23, %c0_24] : memref<1x18x18x4xbf16, #tpu.memory_space<vmem>>, vector<1x16x16x4xbf16>
    %35 = vector.shape_cast %34 : vector<1x16x16x4xbf16> to vector<16x16x4xbf16>
    %36 = vector.shape_cast %35 : vector<16x16x4xbf16> to vector<256x4xbf16>
    %c0_25 = arith.constant 0 : index
    %c20 = arith.constant 20 : index
    %37 = vector.load %arg6[%c0_25, %c20] : memref<256x36xbf16, #tpu.memory_space<vmem>>, vector<256x4xbf16>
    tpu.vector_store %arg6[%c0_25, %c20], %36 {strides = array<i32>} : memref<256x36xbf16, #tpu.memory_space<vmem>>, vector<256x4xbf16>,
    %c2_i32 = arith.constant 2 : i32
    %38 = arith.addi %1, %c2_i32 : i32
    %c0_26 = arith.constant 0 : index
    %39 = arith.index_cast %38 : i32 to index
    %c0_27 = arith.constant 0 : index
    %c0_28 = arith.constant 0 : index
    %40 = vector.load %arg2[%c0_26, %39, %c0_27, %c0_28] : memref<1x18x18x4xbf16, #tpu.memory_space<vmem>>, vector<1x16x16x4xbf16>
    %41 = vector.shape_cast %40 : vector<1x16x16x4xbf16> to vector<16x16x4xbf16>
    %42 = vector.shape_cast %41 : vector<16x16x4xbf16> to vector<256x4xbf16>
    %c0_29 = arith.constant 0 : index
    %c24 = arith.constant 24 : index
    %43 = vector.load %arg6[%c0_29, %c24] : memref<256x36xbf16, #tpu.memory_space<vmem>>, vector<256x4xbf16>
    tpu.vector_store %arg6[%c0_29, %c24], %42 {strides = array<i32>} : memref<256x36xbf16, #tpu.memory_space<vmem>>, vector<256x4xbf16>,
    %c2_i32_30 = arith.constant 2 : i32
    %44 = arith.addi %1, %c2_i32_30 : i32
    %c0_31 = arith.constant 0 : index
    %45 = arith.index_cast %44 : i32 to index
    %c1_32 = arith.constant 1 : index
    %c0_33 = arith.constant 0 : index
    %46 = vector.load %arg2[%c0_31, %45, %c1_32, %c0_33] : memref<1x18x18x4xbf16, #tpu.memory_space<vmem>>, vector<1x16x16x4xbf16>
    %47 = vector.shape_cast %46 : vector<1x16x16x4xbf16> to vector<16x16x4xbf16>
    %48 = vector.shape_cast %47 : vector<16x16x4xbf16> to vector<256x4xbf16>
    %c0_34 = arith.constant 0 : index
    %c28 = arith.constant 28 : index
    %49 = vector.load %arg6[%c0_34, %c28] : memref<256x36xbf16, #tpu.memory_space<vmem>>, vector<256x4xbf16>
    tpu.vector_store %arg6[%c0_34, %c28], %48 {strides = array<i32>} : memref<256x36xbf16, #tpu.memory_space<vmem>>, vector<256x4xbf16>,
    %c2_i32_35 = arith.constant 2 : i32
    %50 = arith.addi %1, %c2_i32_35 : i32
    %c0_36 = arith.constant 0 : index
    %51 = arith.index_cast %50 : i32 to index
    %c2_37 = arith.constant 2 : index
    %c0_38 = arith.constant 0 : index
    %52 = vector.load %arg2[%c0_36, %51, %c2_37, %c0_38] : memref<1x18x18x4xbf16, #tpu.memory_space<vmem>>, vector<1x16x16x4xbf16>
    %53 = vector.shape_cast %52 : vector<1x16x16x4xbf16> to vector<16x16x4xbf16>
    %54 = vector.shape_cast %53 : vector<16x16x4xbf16> to vector<256x4xbf16>
    %c0_39 = arith.constant 0 : index
    %c32 = arith.constant 32 : index
    %55 = vector.load %arg6[%c0_39, %c32] : memref<256x36xbf16, #tpu.memory_space<vmem>>, vector<256x4xbf16>
    tpu.vector_store %arg6[%c0_39, %c32], %54 {strides = array<i32>} : memref<256x36xbf16, #tpu.memory_space<vmem>>, vector<256x4xbf16>,
    %c0_40 = arith.constant 0 : index
    %c0_41 = arith.constant 0 : index
    %56 = vector.load %arg3[%c0_40, %c0_41] : memref<8x36xbf16, #tpu.memory_space<vmem>>, vector<8x36xbf16>
    %c0_42 = arith.constant 0 : index
    %c0_43 = arith.constant 0 : index
    %57 = vector.load %arg6[%c0_42, %c0_43] : memref<256x36xbf16, #tpu.memory_space<vmem>>, vector<256x36xbf16>
    "tpu.trace_start"() <{level = 10 : i32, message = "ok,mk->om"}> : () -> ()
    %cst = arith.constant dense<0.000000e+00> : vector<8x256xf32>
    %58 = tpu.matmul %56, %57, %cst {dimension_numbers = #tpu.dot_dimension_numbers<[1], [1], [0], [0], [0, 0, 1, 0], [], []>} : vector<8x36xbf16>, vector<256x36xbf16>, vector<8x256xf32> -> vector<8x256xf32>
    "tpu.trace_stop"() : () -> ()
    %c0_44 = arith.constant 0 : index
    %c0_45 = arith.constant 0 : index
    %59 = vector.load %arg4[%c0_44, %c0_45] : memref<8x1xf32, #tpu.memory_space<vmem>>, vector<8x1xf32>
    %60 = vector.broadcast %59 : vector<8x1xf32> to vector<8x256xf32>
    %61 = arith.addf %58, %60 : vector<8x256xf32>
    %cst_46 = arith.constant 0.000000e+00 : f32
    %62 = vector.broadcast %cst_46 : f32 to vector<8x256xf32>
    %63 = arith.maximumf %61, %62 : vector<8x256xf32>
    %c0_47 = arith.constant 0 : index
    %c0_48 = arith.constant 0 : index
    %c0_49 = arith.constant 0 : index
    %64 = vector.load %arg5[%c0_47, %c0_48, %c0_49] : memref<1x8x256xf32, #tpu.memory_space<vmem>>, vector<1x8x256xf32>
    %65 = vector.shape_cast %64 : vector<1x8x256xf32> to vector<8x256xf32>
    %66 = vector.shape_cast %63 : vector<8x256xf32> to vector<1x8x256xf32>
    tpu.vector_store %arg5[%c0_47, %c0_48, %c0_49], %66 {strides = array<i32>} : memref<1x8x256xf32, #tpu.memory_space<vmem>>, vector<1x8x256xf32>,
    return
  }
  func.func @transform_0(%arg0: i32, %arg1: i32) -> (i32, i32, i32, i32) {
    %c0_i32 = arith.constant 0 : i32
    %c0_i32_0 = arith.constant 0 : i32
    %c0_i32_1 = arith.constant 0 : i32
    %c0_i32_2 = arith.constant 0 : i32
    return %arg0, %c0_i32, %c0_i32_0, %c0_i32_1 : i32, i32, i32, i32
  }
  func.func @transform_1(%arg0: i32, %arg1: i32) -> (i32, i32) {
    %c0_i32 = arith.constant 0 : i32
    %c0_i32_0 = arith.constant 0 : i32
    %c0_i32_1 = arith.constant 0 : i32
    return %c0_i32, %c0_i32_0 : i32, i32
  }
  func.func @transform_2(%arg0: i32, %arg1: i32) -> (i32, i32) {
    %c0_i32 = arith.constant 0 : i32
    %c0_i32_0 = arith.constant 0 : i32
    %c0_i32_1 = arith.constant 0 : i32
    return %c0_i32, %c0_i32_0 : i32, i32
  }
  func.func @transform_3(%arg0: i32, %arg1: i32) -> (i32, i32, i32) {
    %c0_i32 = arith.constant 0 : i32
    %c0_i32_0 = arith.constant 0 : i32
    return %arg0, %c0_i32, %arg1 : i32, i32, i32
  }
}

</mosaic_0001>

<llo_original>
// kernel: tpu_custom_call.1
$region0: #{tpu_custom_call.1}
  #allocation0 [shape = 'u32[]', space=smem, size = 0x4, offset = 0x4, fixed_abs, tag = 'smem constant byte address 0x4 - core index']
  #allocation1 [shape = 'u32[144,128]{1,0:T(1,128)}', space=vmem, size = 0x12000, scoped, tag = 'internal scratch']
  #allocation2 [shape = 'bf16[256,36]{1,0:T(16,128)(2,1)}', space=vmem, size = 0x10000, scoped, tag = 'scratch operand']
  %s0 = inlined_call_operand.vmem [shape: bf16[2,18,18,4], index: 0, kind: input, shape index: {}]
  %s1 = inlined_call_operand.vmem [shape: bf16[8,36], index: 1, kind: input, shape index: {}]
  %s2 = inlined_call_operand.vmem [shape: f32[8,1], index: 2, kind: input, shape index: {}]
  %s3 = inlined_call_operand.hbm [shape: f32[2,8,256], index: 3, kind: output, shape index: {}]
  %s4 = sld [smem:[#allocation0]]
  $region45: #{tpu_custom_call.1} parent=0
    _
  %s6 = ssub.s32 1, %s4
  %s7 = scalar_select 0, %s6, %s4
  $region1: #{tpu_custom_call.1} parent=0
    #allocation3 [shape = 'u8[16384]{0}', space=vmem, size = 0x4000, scoped, tag = 'output window, operand 0']
    #allocation4 [shape = 's32[2]{0}', space=sflag, size = 0x8, scoped, tag = 'scoped memory for tpu_custom_call.1']
    %8 = vsyncpa [#allocation4], 0
    %s9 = scalar_lea.sflag [#allocation4], 1
    %10 = vsyncpa %s9, 0
    loop: start=0, step=1, limit=4
    $region2: #{tpu_custom_call.1} parent=1 // loop_pre_header
      _
    $region3: #{tpu_custom_call.1} parent=1 // loop_header
      %s12 = sphi 0, %s16
      %p13 = scmp.ge.s32.totalorder %s12, 4
      %s19 = sphi 0, %s31
      %s20 = sphi 0, %s27
      %s21 = sphi 0, %s19
      %s22 = sphi 0, %s20
      %s23 = sphi 0, %s21
      %s24 = sphi 0, %s22
      %s34 = sphi 0, %s36
      %s37 = sphi 0, %s34
      %s38 = sphi 0, %s37
      %s54 = sphi 0, %s38
      %s58 = sphi 0, %s58
      %s60 = sphi 0, %s58
      %s61 = sphi 0, %s60
      %s75 = sphi 0, %s61
      %s79 = sphi 0, %s79
      %s81 = sphi 0, %s79
      %s82 = sphi 0, %s81
      %s96 = sphi 0, %s82
      %s104 = sphi 0, %s106
      %s107 = sphi 0, %s104
      %s108 = sphi 0, %s107
      %s124 = sphi 0, %s108
    $region4: #{tpu_custom_call.1} parent=1 // loop_header_branch
      %15 = sbr.rel (%p13) target = $region8
    $region5: #{tpu_custom_call.1} parent=1 // loop_body
      %s17 = ssub.s32 %s12, 1
      %s18 = ssub.s32 %s12, 2
      %s25 = sadd.s32 1, %s20
      %p26 = scmp.ge.s32.totalorder %s25, 1
      %s27 = scalar_select %p26, 0, %s25
      %s28 = sadd.s32 1, %s19
      %s29 = scalar_select %p26, %s28, %s19
      %p30 = scmp.ge.s32.totalorder %s29, 2
      %s31 = scalar_select %p30, 0, %s29
      %s32 = ssub.s32 %s19, %s31
      %p33 = scmp.eq.s32.totalorder %s32, 0
      %s35 = sadd.s32 %s34, 1
      %s36 = scalar_select %p33, %s34, %s35
      %p39 = pneg %p33
      %p40 = scmp.eq.s32.totalorder %s12, 1
      %p41 = por %p39, %p40
      %p42 = scmp.ne.s32.totalorder %s34, %s37
      %p43 = scmp.eq.s32.totalorder %s12, 0
      %p44 = por %p42, %p43
      %p45 = scmp.ne.s32.totalorder %s34, %s37
      %p46 = scmp.eq.s32.totalorder %s17, 1
      %p47 = por %p45, %p46
      %p48 = scmp.ne.s32.totalorder %s37, %s38
      %p49 = scmp.eq.s32.totalorder %s17, 0
      %p50 = por %p48, %p49
      %p51 = scmp.ne.s32.totalorder %s37, %s38
      %p52 = scmp.eq.s32.totalorder %s18, 1
      %p53 = por %p51, %p52
      %p55 = scmp.ne.s32.totalorder %s38, %s54
      %p56 = scmp.eq.s32.totalorder %s18, 0
      %p57 = por %p55, %p56
      %s59 = sadd.s32 %s58, 1
      %p62 = scmp.eq.s32.totalorder %s12, 1
      %p63 = scmp.ne.s32.totalorder %s58, %s60
      %p64 = scmp.eq.s32.totalorder %s12, 0
      %p65 = por %p63, %p64
      %p66 = scmp.ne.s32.totalorder %s58, %s60
      %p67 = scmp.eq.s32.totalorder %s17, 1
      %p68 = por %p66, %p67
      %p69 = scmp.ne.s32.totalorder %s60, %s61
      %p70 = scmp.eq.s32.totalorder %s17, 0
      %p71 = por %p69, %p70
      %p72 = scmp.ne.s32.totalorder %s60, %s61
      %p73 = scmp.eq.s32.totalorder %s18, 1
      %p74 = por %p72, %p73
      %p76 = scmp.ne.s32.totalorder %s61, %s75
      %p77 = scmp.eq.s32.totalorder %s18, 0
      %p78 = por %p76, %p77
      %s80 = sadd.s32 %s79, 1
      %p83 = scmp.eq.s32.totalorder %s12, 1
      %p84 = scmp.ne.s32.totalorder %s79, %s81
      %p85 = scmp.eq.s32.totalorder %s12, 0
      %p86 = por %p84, %p85
      %p87 = scmp.ne.s32.totalorder %s79, %s81
      %p88 = scmp.eq.s32.totalorder %s17, 1
      %p89 = por %p87, %p88
      %p90 = scmp.ne.s32.totalorder %s81, %s82
      %p91 = scmp.eq.s32.totalorder %s17, 0
      %p92 = por %p90, %p91
      %p93 = scmp.ne.s32.totalorder %s81, %s82
      %p94 = scmp.eq.s32.totalorder %s18, 1
      %p95 = por %p93, %p94
      %p97 = scmp.ne.s32.totalorder %s82, %s96
      %p98 = scmp.eq.s32.totalorder %s18, 0
      %p99 = por %p97, %p98
      %s100 = ssub.s32 %s19, %s31
      %s101 = ssub.s32 %s20, %s27
      %s102 = sor.u32 %s100, %s101
      %p103 = scmp.eq.s32.totalorder %s102, 0
      %s105 = sadd.s32 %s104, 1
      %s106 = scalar_select %p103, %s104, %s105
      %p109 = pneg %p103
      %p110 = scmp.eq.s32.totalorder %s12, 1
      %p111 = por %p109, %p110
      %p112 = scmp.ne.s32.totalorder %s104, %s107
      %p113 = scmp.eq.s32.totalorder %s12, 0
      %p114 = por %p112, %p113
      %p115 = scmp.ne.s32.totalorder %s104, %s107
      %p116 = scmp.eq.s32.totalorder %s17, 1
      %p117 = por %p115, %p116
      %p118 = scmp.ne.s32.totalorder %s107, %s108
      %p119 = scmp.eq.s32.totalorder %s17, 0
      %p120 = por %p118, %p119
      %p121 = scmp.ne.s32.totalorder %s107, %s108
      %p122 = scmp.eq.s32.totalorder %s18, 1
      %p123 = por %p121, %p122
      %p125 = scmp.ne.s32.totalorder %s108, %s124
      %p126 = scmp.eq.s32.totalorder %s18, 0
      %p127 = por %p125, %p126
      %p128 = scmp.le.s32.totalorder 1, %s12
      %p129 = scmp.lt.s32.totalorder %s12, 3
      %p130 = pnand %p128, %p129
      %p131 = pneg %p130
      // Predicated region
      $region9: #{tpu_custom_call.1} parent=5 // pred_check
        _
      $region10: #{tpu_custom_call.1} parent=5 // pred_check_branch
        %133 = sbr.rel (%p130) target = $region12
      $region11: #{tpu_custom_call.1} parent=5 // pred_region
        %s134 = ssub.s32 %s12, 1
        // Predicated region
        $region13: #{tpu_custom_call.1} parent=11 // pred_check
          %p135 = pneg %p71
        $region14: #{tpu_custom_call.1} parent=11 // pred_check_branch
          %137 = sbr.rel (%p135) target = $region16
        $region15: #{tpu_custom_call.1} parent=11 // pred_region
          _
        $region16: #{tpu_custom_call.1} parent=11 // pred_fallthru
          _
        // Predicated region
        $region17: #{tpu_custom_call.1} parent=11 // pred_check
          %p138 = pneg %p92
        $region18: #{tpu_custom_call.1} parent=11 // pred_check_branch
          %140 = sbr.rel (%p138) target = $region20
        $region19: #{tpu_custom_call.1} parent=11 // pred_region
          _
        $region20: #{tpu_custom_call.1} parent=11 // pred_fallthru
          _
      $region12: #{tpu_custom_call.1} parent=5 // pred_fallthru
        _
      %p141 = scmp.lt.s32.totalorder %s12, 2
      // Predicated region
      $region21: #{tpu_custom_call.1} parent=5 // pred_check
        %p142 = pneg %p141
      $region22: #{tpu_custom_call.1} parent=5 // pred_check_branch
        %144 = sbr.rel (%p142) target = $region24
      $region23: #{tpu_custom_call.1} parent=5 // pred_region
        // Predicated region
        $region25: #{tpu_custom_call.1} parent=23 // pred_check
          %p145 = pneg %p44
        $region26: #{tpu_custom_call.1} parent=23 // pred_check_branch
          %147 = sbr.rel (%p145) target = $region28
        $region27: #{tpu_custom_call.1} parent=23 // pred_region
          %p148 = scmp.lt.s32.totalorder %s19, 1
          %s149 = scalar_select %p148, %s19, 1
          %s150 = smul.addr %s149, 54
          %s151 = smul.addr %s150, 4
          %s152 = scalar_lea.vmem %s0, %s151
        $region28: #{tpu_custom_call.1} parent=23 // pred_fallthru
          _
      $region24: #{tpu_custom_call.1} parent=5 // pred_fallthru
        _
      %p153 = scmp.le.s32.totalorder 1, %s12
      %p154 = scmp.lt.s32.totalorder %s12, 3
      %p155 = pnand %p153, %p154
      %p156 = pneg %p155
      // Predicated region
      $region29: #{tpu_custom_call.1} parent=5 // pred_check
        _
      $region30: #{tpu_custom_call.1} parent=5 // pred_check_branch
        %158 = sbr.rel (%p155) target = $region32
      $region31: #{tpu_custom_call.1} parent=5 // pred_region
        %s159 = ssub.s32 %s12, 1
        %p160 = scmp.lt.s32.totalorder %s21, 1
        %s161 = scalar_select %p160, %s21, 1
        %s162 = smul.addr %s161, 54
        %s163 = smul.addr %s162, 4
        %s164 = scalar_lea.vmem %s0, %s163
        %p165 = pneg %p50
        %p166 = pneg %p47
        %p167 = pneg %p71
        %p168 = pneg %p68
        %p169 = pneg %p92
        %p170 = pneg %p89
        %p171 = pneg %p120
        %p172 = pneg %p117
        %s173 = sand.u32 %s107, 1
        %s174 = scalar_lea.sflag [#allocation4], %s173
        %s175 = sand.u32 %s107, 1
        %s176 = smul.addr %s175, 16
        %s177 = scalar_lea.vmem [#allocation3], %s176
        %p178 = scmp.lt.s32.totalorder %s21, 1
        %s179 = scalar_select %p178, %s21, 1
        %s180 = smul.addr %s179, 54
        %s181 = smul.addr %s180, 4
        %s182 = scalar_lea.vmem %s0, %s181
        %s183 = smul.u32 2, %s22
        %s185 = smul.u32 %s22, 16
        %s186 = smul.u32 %s185, 3
        %s187 = smul.addr %s186, 4
        %s188 = scalar_lea.vmem %s182, %s187
        %v189 = vld [vmem:[%s188] sm:$0xf]
        %v190 = vld [vmem:[%s188 + $0x4] sm:$0xf]
        %v191 = vld [vmem:[%s188 + $0xc] sm:$0xf]
        %v192 = vld [vmem:[%s188 + $0x10] sm:$0xf]
        %v193 = vld [vmem:[%s188 + $0x18] sm:$0xf]
        %v194 = vld [vmem:[%s188 + $0x1c] sm:$0xf]
        %v195 = vld [vmem:[%s188 + $0x24] sm:$0xf]
        %v196 = vld [vmem:[%s188 + $0x28] sm:$0xf]
        %v197 = vld [vmem:[%s188 + $0x30] sm:$0xf]
        %v198 = vld [vmem:[%s188 + $0x34] sm:$0xf]
        %v199 = vld [vmem:[%s188 + $0x3c] sm:$0xf]
        %v200 = vld [vmem:[%s188 + $0x40] sm:$0xf]
        %v201 = vld [vmem:[%s188 + $0x48] sm:$0xf]
        %v202 = vld [vmem:[%s188 + $0x4c] sm:$0xf]
        %v203 = vld [vmem:[%s188 + $0x54] sm:$0xf]
        %v204 = vld [vmem:[%s188 + $0x58] sm:$0xf]
        %v205 = vld [vmem:[%s188 + $0x60] sm:$0xf]
        %v206 = vld [vmem:[%s188 + $0x64] sm:$0xf]
        %v207 = vld [vmem:[%s188 + $0x6c] sm:$0xf]
        %v208 = vld [vmem:[%s188 + $0x70] sm:$0xf]
        %v209 = vld [vmem:[%s188 + $0x78] sm:$0xf]
        %v210 = vld [vmem:[%s188 + $0x7c] sm:$0xf]
        %v211 = vld [vmem:[%s188 + $0x84] sm:$0xf]
        %v212 = vld [vmem:[%s188 + $0x88] sm:$0xf]
        %v213 = vld [vmem:[%s188 + $0x90] sm:$0xf]
        %v214 = vld [vmem:[%s188 + $0x94] sm:$0xf]
        %v215 = vld [vmem:[%s188 + $0x9c] sm:$0xf]
        %v216 = vld [vmem:[%s188 + $0xa0] sm:$0xf]
        %v217 = vld [vmem:[%s188 + $0xa8] sm:$0xf]
        %v218 = vld [vmem:[%s188 + $0xac] sm:$0xf]
        %v219 = vld [vmem:[%s188 + $0xb4] sm:$0xf]
        %v220 = vld [vmem:[%s188 + $0xb8] sm:$0xf]
        %v253 = vunpack.c.l.b16 %v189
        %v254 = vunpack.c.l.b16 %v190
        %v255 = vunpack.c.l.b16 %v191
        %v256 = vunpack.c.l.b16 %v192
        %v257 = vunpack.c.l.b16 %v193
        %v258 = vunpack.c.l.b16 %v194
        %v259 = vunpack.c.l.b16 %v195
        %v260 = vunpack.c.l.b16 %v196
        %v261 = vunpack.c.l.b16 %v197
        %v262 = vunpack.c.l.b16 %v198
        %v263 = vunpack.c.l.b16 %v199
        %v264 = vunpack.c.l.b16 %v200
        %v265 = vunpack.c.l.b16 %v201
        %v266 = vunpack.c.l.b16 %v202
        %v267 = vunpack.c.l.b16 %v203
        %v268 = vunpack.c.l.b16 %v204
        %v269 = vunpack.c.l.b16 %v205
        %v270 = vunpack.c.l.b16 %v206
        %v271 = vunpack.c.l.b16 %v207
        %v272 = vunpack.c.l.b16 %v208
        %v273 = vunpack.c.l.b16 %v209
        %v274 = vunpack.c.l.b16 %v210
        %v275 = vunpack.c.l.b16 %v211
        %v276 = vunpack.c.l.b16 %v212
        %v277 = vunpack.c.l.b16 %v213
        %v278 = vunpack.c.l.b16 %v214
        %v279 = vunpack.c.l.b16 %v215
        %v280 = vunpack.c.l.b16 %v216
        %v281 = vunpack.c.l.b16 %v217
        %v282 = vunpack.c.l.b16 %v218
        %v283 = vunpack.c.l.b16 %v219
        %v284 = vunpack.c.l.b16 %v220
        %v285 = vpack.c.b16 %v254, %v253
        %v286 = vpack.c.b16 %v256, %v255
        %v287 = vpack.c.b16 %v258, %v257
        %v288 = vpack.c.b16 %v260, %v259
        %v289 = vpack.c.b16 %v262, %v261
        %v290 = vpack.c.b16 %v264, %v263
        %v291 = vpack.c.b16 %v266, %v265
        %v292 = vpack.c.b16 %v268, %v267
        %v293 = vpack.c.b16 %v270, %v269
        %v294 = vpack.c.b16 %v272, %v271
        %v295 = vpack.c.b16 %v274, %v273
        %v296 = vpack.c.b16 %v276, %v275
        %v297 = vpack.c.b16 %v278, %v277
        %v298 = vpack.c.b16 %v280, %v279
        %v299 = vpack.c.b16 %v282, %v281
        %v300 = vpack.c.b16 %v284, %v283
        %vm317 = vcmask 31744
        %318 = vst.msk [vmem:[#allocation2] sm:$0xff] %vm317, %v285
        %319 = vst.msk [vmem:[#allocation2 + $0x8] sm:$0xff] %vm317, %v286
        %320 = vst.msk [vmem:[#allocation2 + $0x10] sm:$0xff] %vm317, %v287
        %321 = vst.msk [vmem:[#allocation2 + $0x18] sm:$0xff] %vm317, %v288
        %322 = vst.msk [vmem:[#allocation2 + $0x20] sm:$0xff] %vm317, %v289
        %323 = vst.msk [vmem:[#allocation2 + $0x28] sm:$0xff] %vm317, %v290
        %324 = vst.msk [vmem:[#allocation2 + $0x30] sm:$0xff] %vm317, %v291
        %325 = vst.msk [vmem:[#allocation2 + $0x38] sm:$0xff] %vm317, %v292
        %326 = vst.msk [vmem:[#allocation2 + $0x40] sm:$0xff] %vm317, %v293
        %327 = vst.msk [vmem:[#allocation2 + $0x48] sm:$0xff] %vm317, %v294
        %328 = vst.msk [vmem:[#allocation2 + $0x50] sm:$0xff] %vm317, %v295
        %329 = vst.msk [vmem:[#allocation2 + $0x58] sm:$0xff] %vm317, %v296
        %330 = vst.msk [vmem:[#allocation2 + $0x60] sm:$0xff] %vm317, %v297
        %331 = vst.msk [vmem:[#allocation2 + $0x68] sm:$0xff] %vm317, %v298
        %332 = vst.msk [vmem:[#allocation2 + $0x70] sm:$0xff] %vm317, %v299
        %333 = vst.msk [vmem:[#allocation2 + $0x78] sm:$0xff] %vm317, %v300
        %v334 = vld [vmem:[%s188] sm:$0xf]
        %v335 = vld [vmem:[%s188 + $0x4] sm:$0xf]
        %v336 = vld [vmem:[%s188 + $0x8] sm:$0x1]
        %v337 = vld [vmem:[%s188 + $0xc] sm:$0xf]
        %v338 = vld [vmem:[%s188 + $0x10] sm:$0xf]
        %v339 = vld [vmem:[%s188 + $0x14] sm:$0x1]
        %v340 = vld [vmem:[%s188 + $0x18] sm:$0xf]
        %v341 = vld [vmem:[%s188 + $0x1c] sm:$0xf]
        %v342 = vld [vmem:[%s188 + $0x20] sm:$0x1]
        %v343 = vld [vmem:[%s188 + $0x24] sm:$0xf]
        %v344 = vld [vmem:[%s188 + $0x28] sm:$0xf]
        %v345 = vld [vmem:[%s188 + $0x2c] sm:$0x1]
        %v346 = vld [vmem:[%s188 + $0x30] sm:$0xf]
        %v347 = vld [vmem:[%s188 + $0x34] sm:$0xf]
        %v348 = vld [vmem:[%s188 + $0x38] sm:$0x1]
        %v349 = vld [vmem:[%s188 + $0x3c] sm:$0xf]
        %v350 = vld [vmem:[%s188 + $0x40] sm:$0xf]
        %v351 = vld [vmem:[%s188 + $0x44] sm:$0x1]
        %v352 = vld [vmem:[%s188 + $0x48] sm:$0xf]
        %v353 = vld [vmem:[%s188 + $0x4c] sm:$0xf]
        %v354 = vld [vmem:[%s188 + $0x50] sm:$0x1]
        %v355 = vld [vmem:[%s188 + $0x54] sm:$0xf]
        %v356 = vld [vmem:[%s188 + $0x58] sm:$0xf]
        %v357 = vld [vmem:[%s188 + $0x5c] sm:$0x1]
        %v358 = vld [vmem:[%s188 + $0x60] sm:$0xf]
        %v359 = vld [vmem:[%s188 + $0x64] sm:$0xf]
        %v360 = vld [vmem:[%s188 + $0x68] sm:$0x1]
        %v361 = vld [vmem:[%s188 + $0x6c] sm:$0xf]
        %v362 = vld [vmem:[%s188 + $0x70] sm:$0xf]
        %v363 = vld [vmem:[%s188 + $0x74] sm:$0x1]
        %v364 = vld [vmem:[%s188 + $0x78] sm:$0xf]
        %v365 = vld [vmem:[%s188 + $0x7c] sm:$0xf]
        %v366 = vld [vmem:[%s188 + $0x80] sm:$0x1]
        %v367 = vld [vmem:[%s188 + $0x84] sm:$0xf]
        %v368 = vld [vmem:[%s188 + $0x88] sm:$0xf]
        %v369 = vld [vmem:[%s188 + $0x8c] sm:$0x1]
        %v370 = vld [vmem:[%s188 + $0x90] sm:$0xf]
        %v371 = vld [vmem:[%s188 + $0x94] sm:$0xf]
        %v372 = vld [vmem:[%s188 + $0x98] sm:$0x1]
        %v373 = vld [vmem:[%s188 + $0x9c] sm:$0xf]
        %v374 = vld [vmem:[%s188 + $0xa0] sm:$0xf]
        %v375 = vld [vmem:[%s188 + $0xa4] sm:$0x1]
        %v376 = vld [vmem:[%s188 + $0xa8] sm:$0xf]
        %v377 = vld [vmem:[%s188 + $0xac] sm:$0xf]
        %v378 = vld [vmem:[%s188 + $0xb0] sm:$0x1]
        %v379 = vld [vmem:[%s188 + $0xb4] sm:$0xf]
        %v380 = vld [vmem:[%s188 + $0xb8] sm:$0xf]
        %v381 = vld [vmem:[%s188 + $0xbc] sm:$0x1]
        %vm382 = vsmask.f32 3328
        %vm383 = vsmask.f32 7440
        %vm384 = vmor %vm382, %vm383
        %v386 = vshrl.u32 %v334, 16
        %v388 = vrot.slane %v386, 4
        %v389 = vshll.u32 %v334, 16
        %v391 = vrot.slane %v389, 5
        %v392 = vor.u32 %v388, %v391
        %v393 = vrot.slane %v392, 4
        %v395 = vshll.u32 %v335, 16
        %v397 = vrot.slane %v395, 5
        %v398 = vsel %vm384, %v393, %v397
        %v399 = vshrl.u32 %v335, 16
        %v401 = vrot.slane %v399, 4
        %v402 = vor.u32 %v401, %v397
        %v403 = vrot.slane %v402, 4
        %v405 = vshll.u32 %v336, 16
        %v407 = vrot.slane %v405, 5
        %v408 = vsel %vm384, %v403, %v407
        %v410 = vshrl.u32 %v337, 16
        %v412 = vrot.slane %v410, 4
        %v413 = vshll.u32 %v337, 16
        %v415 = vrot.slane %v413, 5
        %v416 = vor.u32 %v412, %v415
        %v417 = vrot.slane %v416, 4
        %v419 = vshll.u32 %v338, 16
        %v421 = vrot.slane %v419, 5
        %v422 = vsel %vm384, %v417, %v421
        %v423 = vshrl.u32 %v338, 16
        %v425 = vrot.slane %v423, 4
        %v426 = vor.u32 %v425, %v421
        %v427 = vrot.slane %v426, 4
        %v429 = vshll.u32 %v339, 16
        %v431 = vrot.slane %v429, 5
        %v432 = vsel %vm384, %v427, %v431
        %v434 = vshrl.u32 %v340, 16
        %v436 = vrot.slane %v434, 4
        %v437 = vshll.u32 %v340, 16
        %v439 = vrot.slane %v437, 5
        %v440 = vor.u32 %v436, %v439
        %v441 = vrot.slane %v440, 4
        %v443 = vshll.u32 %v341, 16
        %v445 = vrot.slane %v443, 5
        %v446 = vsel %vm384, %v441, %v445
        %v447 = vshrl.u32 %v341, 16
        %v449 = vrot.slane %v447, 4
        %v450 = vor.u32 %v449, %v445
        %v451 = vrot.slane %v450, 4
        %v453 = vshll.u32 %v342, 16
        %v455 = vrot.slane %v453, 5
        %v456 = vsel %vm384, %v451, %v455
        %v458 = vshrl.u32 %v343, 16
        %v460 = vrot.slane %v458, 4
        %v461 = vshll.u32 %v343, 16
        %v463 = vrot.slane %v461, 5
        %v464 = vor.u32 %v460, %v463
        %v465 = vrot.slane %v464, 4
        %v467 = vshll.u32 %v344, 16
        %v469 = vrot.slane %v467, 5
        %v470 = vsel %vm384, %v465, %v469
        %v471 = vshrl.u32 %v344, 16
        %v473 = vrot.slane %v471, 4
        %v474 = vor.u32 %v473, %v469
        %v475 = vrot.slane %v474, 4
        %v477 = vshll.u32 %v345, 16
        %v479 = vrot.slane %v477, 5
        %v480 = vsel %vm384, %v475, %v479
        %v482 = vshrl.u32 %v346, 16
        %v484 = vrot.slane %v482, 4
        %v485 = vshll.u32 %v346, 16
        %v487 = vrot.slane %v485, 5
        %v488 = vor.u32 %v484, %v487
        %v489 = vrot.slane %v488, 4
        %v491 = vshll.u32 %v347, 16
        %v493 = vrot.slane %v491, 5
        %v494 = vsel %vm384, %v489, %v493
        %v495 = vshrl.u32 %v347, 16
        %v497 = vrot.slane %v495, 4
        %v498 = vor.u32 %v497, %v493
        %v499 = vrot.slane %v498, 4
        %v501 = vshll.u32 %v348, 16
        %v503 = vrot.slane %v501, 5
        %v504 = vsel %vm384, %v499, %v503
        %v506 = vshrl.u32 %v349, 16
        %v508 = vrot.slane %v506, 4
        %v509 = vshll.u32 %v349, 16
        %v511 = vrot.slane %v509, 5
        %v512 = vor.u32 %v508, %v511
        %v513 = vrot.slane %v512, 4
        %v515 = vshll.u32 %v350, 16
        %v517 = vrot.slane %v515, 5
        %v518 = vsel %vm384, %v513, %v517
        %v519 = vshrl.u32 %v350, 16
        %v521 = vrot.slane %v519, 4
        %v522 = vor.u32 %v521, %v517
        %v523 = vrot.slane %v522, 4
        %v525 = vshll.u32 %v351, 16
        %v527 = vrot.slane %v525, 5
        %v528 = vsel %vm384, %v523, %v527
        %v530 = vshrl.u32 %v352, 16
        %v532 = vrot.slane %v530, 4
        %v533 = vshll.u32 %v352, 16
        %v535 = vrot.slane %v533, 5
        %v536 = vor.u32 %v532, %v535
        %v537 = vrot.slane %v536, 4
        %v539 = vshll.u32 %v353, 16
        %v541 = vrot.slane %v539, 5
        %v542 = vsel %vm384, %v537, %v541
        %v543 = vshrl.u32 %v353, 16
        %v545 = vrot.slane %v543, 4
        %v546 = vor.u32 %v545, %v541
        %v547 = vrot.slane %v546, 4
        %v549 = vshll.u32 %v354, 16
        %v551 = vrot.slane %v549, 5
        %v552 = vsel %vm384, %v547, %v551
        %v554 = vshrl.u32 %v355, 16
        %v556 = vrot.slane %v554, 4
        %v557 = vshll.u32 %v355, 16
        %v559 = vrot.slane %v557, 5
        %v560 = vor.u32 %v556, %v559
        %v561 = vrot.slane %v560, 4
        %v563 = vshll.u32 %v356, 16
        %v565 = vrot.slane %v563, 5
        %v566 = vsel %vm384, %v561, %v565
        %v567 = vshrl.u32 %v356, 16
        %v569 = vrot.slane %v567, 4
        %v570 = vor.u32 %v569, %v565
        %v571 = vrot.slane %v570, 4
        %v573 = vshll.u32 %v357, 16
        %v575 = vrot.slane %v573, 5
        %v576 = vsel %vm384, %v571, %v575
        %v578 = vshrl.u32 %v358, 16
        %v580 = vrot.slane %v578, 4
        %v581 = vshll.u32 %v358, 16
        %v583 = vrot.slane %v581, 5
        %v584 = vor.u32 %v580, %v583
        %v585 = vrot.slane %v584, 4
        %v587 = vshll.u32 %v359, 16
        %v589 = vrot.slane %v587, 5
        %v590 = vsel %vm384, %v585, %v589
        %v591 = vshrl.u32 %v359, 16
        %v593 = vrot.slane %v591, 4
        %v594 = vor.u32 %v593, %v589
        %v595 = vrot.slane %v594, 4
        %v597 = vshll.u32 %v360, 16
        %v599 = vrot.slane %v597, 5
        %v600 = vsel %vm384, %v595, %v599
        %v602 = vshrl.u32 %v361, 16
        %v604 = vrot.slane %v602, 4
        %v605 = vshll.u32 %v361, 16
        %v607 = vrot.slane %v605, 5
        %v608 = vor.u32 %v604, %v607
        %v609 = vrot.slane %v608, 4
        %v611 = vshll.u32 %v362, 16
        %v613 = vrot.slane %v611, 5
        %v614 = vsel %vm384, %v609, %v613
        %v615 = vshrl.u32 %v362, 16
        %v617 = vrot.slane %v615, 4
        %v618 = vor.u32 %v617, %v613
        %v619 = vrot.slane %v618, 4
        %v621 = vshll.u32 %v363, 16
        %v623 = vrot.slane %v621, 5
        %v624 = vsel %vm384, %v619, %v623
        %v626 = vshrl.u32 %v364, 16
        %v628 = vrot.slane %v626, 4
        %v629 = vshll.u32 %v364, 16
        %v631 = vrot.slane %v629, 5
        %v632 = vor.u32 %v628, %v631
        %v633 = vrot.slane %v632, 4
        %v635 = vshll.u32 %v365, 16
        %v637 = vrot.slane %v635, 5
        %v638 = vsel %vm384, %v633, %v637
        %v639 = vshrl.u32 %v365, 16
        %v641 = vrot.slane %v639, 4
        %v642 = vor.u32 %v641, %v637
        %v643 = vrot.slane %v642, 4
        %v645 = vshll.u32 %v366, 16
        %v647 = vrot.slane %v645, 5
        %v648 = vsel %vm384, %v643, %v647
        %v650 = vshrl.u32 %v367, 16
        %v652 = vrot.slane %v650, 4
        %v653 = vshll.u32 %v367, 16
        %v655 = vrot.slane %v653, 5
        %v656 = vor.u32 %v652, %v655
        %v657 = vrot.slane %v656, 4
        %v659 = vshll.u32 %v368, 16
        %v661 = vrot.slane %v659, 5
        %v662 = vsel %vm384, %v657, %v661
        %v663 = vshrl.u32 %v368, 16
        %v665 = vrot.slane %v663, 4
        %v666 = vor.u32 %v665, %v661
        %v667 = vrot.slane %v666, 4
        %v669 = vshll.u32 %v369, 16
        %v671 = vrot.slane %v669, 5
        %v672 = vsel %vm384, %v667, %v671
        %v674 = vshrl.u32 %v370, 16
        %v676 = vrot.slane %v674, 4
        %v677 = vshll.u32 %v370, 16
        %v679 = vrot.slane %v677, 5
        %v680 = vor.u32 %v676, %v679
        %v681 = vrot.slane %v680, 4
        %v683 = vshll.u32 %v371, 16
        %v685 = vrot.slane %v683, 5
        %v686 = vsel %vm384, %v681, %v685
        %v687 = vshrl.u32 %v371, 16
        %v689 = vrot.slane %v687, 4
        %v690 = vor.u32 %v689, %v685
        %v691 = vrot.slane %v690, 4
        %v693 = vshll.u32 %v372, 16
        %v695 = vrot.slane %v693, 5
        %v696 = vsel %vm384, %v691, %v695
        %v698 = vshrl.u32 %v373, 16
        %v700 = vrot.slane %v698, 4
        %v701 = vshll.u32 %v373, 16
        %v703 = vrot.slane %v701, 5
        %v704 = vor.u32 %v700, %v703
        %v705 = vrot.slane %v704, 4
        %v707 = vshll.u32 %v374, 16
        %v709 = vrot.slane %v707, 5
        %v710 = vsel %vm384, %v705, %v709
        %v711 = vshrl.u32 %v374, 16
        %v713 = vrot.slane %v711, 4
        %v714 = vor.u32 %v713, %v709
        %v715 = vrot.slane %v714, 4
        %v717 = vshll.u32 %v375, 16
        %v719 = vrot.slane %v717, 5
        %v720 = vsel %vm384, %v715, %v719
        %v722 = vshrl.u32 %v376, 16
        %v724 = vrot.slane %v722, 4
        %v725 = vshll.u32 %v376, 16
        %v727 = vrot.slane %v725, 5
        %v728 = vor.u32 %v724, %v727
        %v729 = vrot.slane %v728, 4
        %v731 = vshll.u32 %v377, 16
        %v733 = vrot.slane %v731, 5
        %v734 = vsel %vm384, %v729, %v733
        %v735 = vshrl.u32 %v377, 16
        %v737 = vrot.slane %v735, 4
        %v738 = vor.u32 %v737, %v733
        %v739 = vrot.slane %v738, 4
        %v741 = vshll.u32 %v378, 16
        %v743 = vrot.slane %v741, 5
        %v744 = vsel %vm384, %v739, %v743
        %v746 = vshrl.u32 %v379, 16
        %v748 = vrot.slane %v746, 4
        %v749 = vshll.u32 %v379, 16
        %v751 = vrot.slane %v749, 5
        %v752 = vor.u32 %v748, %v751
        %v753 = vrot.slane %v752, 4
        %v755 = vshll.u32 %v380, 16
        %v757 = vrot.slane %v755, 5
        %v758 = vsel %vm384, %v753, %v757
        %v759 = vshrl.u32 %v380, 16
        %v761 = vrot.slane %v759, 4
        %v762 = vor.u32 %v761, %v757
        %v763 = vrot.slane %v762, 4
        %v765 = vshll.u32 %v381, 16
        %v767 = vrot.slane %v765, 5
        %v768 = vsel %vm384, %v763, %v767
        %v769 = vunpack.c.l.b16 %v398
        %v770 = vunpack.c.l.b16 %v408
        %v771 = vunpack.c.l.b16 %v422
        %v772 = vunpack.c.l.b16 %v432
        %v773 = vunpack.c.l.b16 %v446
        %v774 = vunpack.c.l.b16 %v456
        %v775 = vunpack.c.l.b16 %v470
        %v776 = vunpack.c.l.b16 %v480
        %v777 = vunpack.c.l.b16 %v494
        %v778 = vunpack.c.l.b16 %v504
        %v779 = vunpack.c.l.b16 %v518
        %v780 = vunpack.c.l.b16 %v528
        %v781 = vunpack.c.l.b16 %v542
        %v782 = vunpack.c.l.b16 %v552
        %v783 = vunpack.c.l.b16 %v566
        %v784 = vunpack.c.l.b16 %v576
        %v785 = vunpack.c.l.b16 %v590
        %v786 = vunpack.c.l.b16 %v600
        %v787 = vunpack.c.l.b16 %v614
        %v788 = vunpack.c.l.b16 %v624
        %v789 = vunpack.c.l.b16 %v638
        %v790 = vunpack.c.l.b16 %v648
        %v791 = vunpack.c.l.b16 %v662
        %v792 = vunpack.c.l.b16 %v672
        %v793 = vunpack.c.l.b16 %v686
        %v794 = vunpack.c.l.b16 %v696
        %v795 = vunpack.c.l.b16 %v710
        %v796 = vunpack.c.l.b16 %v720
        %v797 = vunpack.c.l.b16 %v734
        %v798 = vunpack.c.l.b16 %v744
        %v799 = vunpack.c.l.b16 %v758
        %v800 = vunpack.c.l.b16 %v768
        %v801 = vpack.c.b16 %v770, %v769
        %v802 = vpack.c.b16 %v772, %v771
        %v803 = vpack.c.b16 %v774, %v773
        %v804 = vpack.c.b16 %v776, %v775
        %v805 = vpack.c.b16 %v778, %v777
        %v806 = vpack.c.b16 %v780, %v779
        %v807 = vpack.c.b16 %v782, %v781
        %v808 = vpack.c.b16 %v784, %v783
        %v809 = vpack.c.b16 %v786, %v785
        %v810 = vpack.c.b16 %v788, %v787
        %v811 = vpack.c.b16 %v790, %v789
        %v812 = vpack.c.b16 %v792, %v791
        %v813 = vpack.c.b16 %v794, %v793
        %v814 = vpack.c.b16 %v796, %v795
        %v815 = vpack.c.b16 %v798, %v797
        %v816 = vpack.c.b16 %v800, %v799
        %817 = vrot.lane.b32.xlu0 %v801, 4
        %v818 = vpop.permute.xlu0 %817
        %819 = vrot.lane.b32.xlu0 %v802, 4
        %v820 = vpop.permute.xlu0 %819
        %821 = vrot.lane.b32.xlu0 %v803, 4
        %v822 = vpop.permute.xlu0 %821
        %823 = vrot.lane.b32.xlu0 %v804, 4
        %v824 = vpop.permute.xlu0 %823
        %825 = vrot.lane.b32.xlu0 %v805, 4
        %v826 = vpop.permute.xlu0 %825
        %827 = vrot.lane.b32.xlu0 %v806, 4
        %v828 = vpop.permute.xlu0 %827
        %829 = vrot.lane.b32.xlu0 %v807, 4
        %v830 = vpop.permute.xlu0 %829
        %831 = vrot.lane.b32.xlu0 %v808, 4
        %v832 = vpop.permute.xlu0 %831
        %833 = vrot.lane.b32.xlu0 %v809, 4
        %v834 = vpop.permute.xlu0 %833
        %835 = vrot.lane.b32.xlu0 %v810, 4
        %v836 = vpop.permute.xlu0 %835
        %837 = vrot.lane.b32.xlu0 %v811, 4
        %v838 = vpop.permute.xlu0 %837
        %839 = vrot.lane.b32.xlu0 %v812, 4
        %v840 = vpop.permute.xlu0 %839
        %841 = vrot.lane.b32.xlu0 %v813, 4
        %v842 = vpop.permute.xlu0 %841
        %843 = vrot.lane.b32.xlu0 %v814, 4
        %v844 = vpop.permute.xlu0 %843
        %845 = vrot.lane.b32.xlu0 %v815, 4
        %v846 = vpop.permute.xlu0 %845
        %847 = vrot.lane.b32.xlu0 %v816, 4
        %v848 = vpop.permute.xlu0 %847
        %vm865 = vcmask 64544
        %866 = vst.msk [vmem:[#allocation2] sm:$0xff] %vm865, %v818
        %867 = vst.msk [vmem:[#allocation2 + $0x8] sm:$0xff] %vm865, %v820
        %868 = vst.msk [vmem:[#allocation2 + $0x10] sm:$0xff] %vm865, %v822
        %869 = vst.msk [vmem:[#allocation2 + $0x18] sm:$0xff] %vm865, %v824
        %870 = vst.msk [vmem:[#allocation2 + $0x20] sm:$0xff] %vm865, %v826
        %871 = vst.msk [vmem:[#allocation2 + $0x28] sm:$0xff] %vm865, %v828
        %872 = vst.msk [vmem:[#allocation2 + $0x30] sm:$0xff] %vm865, %v830
        %873 = vst.msk [vmem:[#allocation2 + $0x38] sm:$0xff] %vm865, %v832
        %874 = vst.msk [vmem:[#allocation2 + $0x40] sm:$0xff] %vm865, %v834
        %875 = vst.msk [vmem:[#allocation2 + $0x48] sm:$0xff] %vm865, %v836
        %876 = vst.msk [vmem:[#allocation2 + $0x50] sm:$0xff] %vm865, %v838
        %877 = vst.msk [vmem:[#allocation2 + $0x58] sm:$0xff] %vm865, %v840
        %878 = vst.msk [vmem:[#allocation2 + $0x60] sm:$0xff] %vm865, %v842
        %879 = vst.msk [vmem:[#allocation2 + $0x68] sm:$0xff] %vm865, %v844
        %880 = vst.msk [vmem:[#allocation2 + $0x70] sm:$0xff] %vm865, %v846
        %881 = vst.msk [vmem:[#allocation2 + $0x78] sm:$0xff] %vm865, %v848
        %v882 = vld [vmem:[%s188] sm:$0xe]
        %v883 = vld [vmem:[%s188 + $0x4] sm:$0xf]
        %v884 = vld [vmem:[%s188 + $0x8] sm:$0x1]
        %v885 = vld [vmem:[%s188 + $0xc] sm:$0xe]
        %v886 = vld [vmem:[%s188 + $0x10] sm:$0xf]
        %v887 = vld [vmem:[%s188 + $0x14] sm:$0x1]
        %v888 = vld [vmem:[%s188 + $0x18] sm:$0xe]
        %v889 = vld [vmem:[%s188 + $0x1c] sm:$0xf]
        %v890 = vld [vmem:[%s188 + $0x20] sm:$0x1]
        %v891 = vld [vmem:[%s188 + $0x24] sm:$0xe]
        %v892 = vld [vmem:[%s188 + $0x28] sm:$0xf]
        %v893 = vld [vmem:[%s188 + $0x2c] sm:$0x1]
        %v894 = vld [vmem:[%s188 + $0x30] sm:$0xe]
        %v895 = vld [vmem:[%s188 + $0x34] sm:$0xf]
        %v896 = vld [vmem:[%s188 + $0x38] sm:$0x1]
        %v897 = vld [vmem:[%s188 + $0x3c] sm:$0xe]
        %v898 = vld [vmem:[%s188 + $0x40] sm:$0xf]
        %v899 = vld [vmem:[%s188 + $0x44] sm:$0x1]
        %v900 = vld [vmem:[%s188 + $0x48] sm:$0xe]
        %v901 = vld [vmem:[%s188 + $0x4c] sm:$0xf]
        %v902 = vld [vmem:[%s188 + $0x50] sm:$0x1]
        %v903 = vld [vmem:[%s188 + $0x54] sm:$0xe]
        %v904 = vld [vmem:[%s188 + $0x58] sm:$0xf]
        %v905 = vld [vmem:[%s188 + $0x5c] sm:$0x1]
        %v906 = vld [vmem:[%s188 + $0x60] sm:$0xe]
        %v907 = vld [vmem:[%s188 + $0x64] sm:$0xf]
        %v908 = vld [vmem:[%s188 + $0x68] sm:$0x1]
        %v909 = vld [vmem:[%s188 + $0x6c] sm:$0xe]
        %v910 = vld [vmem:[%s188 + $0x70] sm:$0xf]
        %v911 = vld [vmem:[%s188 + $0x74] sm:$0x1]
        %v912 = vld [vmem:[%s188 + $0x78] sm:$0xe]
        %v913 = vld [vmem:[%s188 + $0x7c] sm:$0xf]
        %v914 = vld [vmem:[%s188 + $0x80] sm:$0x1]
        %v915 = vld [vmem:[%s188 + $0x84] sm:$0xe]
        %v916 = vld [vmem:[%s188 + $0x88] sm:$0xf]
        %v917 = vld [vmem:[%s188 + $0x8c] sm:$0x1]
        %v918 = vld [vmem:[%s188 + $0x90] sm:$0xe]
        %v919 = vld [vmem:[%s188 + $0x94] sm:$0xf]
        %v920 = vld [vmem:[%s188 + $0x98] sm:$0x1]
        %v921 = vld [vmem:[%s188 + $0x9c] sm:$0xe]
        %v922 = vld [vmem:[%s188 + $0xa0] sm:$0xf]
        %v923 = vld [vmem:[%s188 + $0xa4] sm:$0x1]
        %v924 = vld [vmem:[%s188 + $0xa8] sm:$0xe]
        %v925 = vld [vmem:[%s188 + $0xac] sm:$0xf]
        %v926 = vld [vmem:[%s188 + $0xb0] sm:$0x1]
        %v927 = vld [vmem:[%s188 + $0xb4] sm:$0xe]
        %v928 = vld [vmem:[%s188 + $0xb8] sm:$0xf]
        %v929 = vld [vmem:[%s188 + $0xbc] sm:$0x1]
        %vm978 = vcmask 1042432
        %vm979 = vcmask 1046532
        %vm980 = vmor %vm978, %vm979
        %v981 = vrot.slane %v882, 5
        %v982 = vrot.slane %v981, 4
        %v983 = vrot.slane %v883, 5
        %v984 = vsel %vm980, %v982, %v983
        %v985 = vrot.slane %v983, 4
        %v986 = vrot.slane %v884, 5
        %v987 = vsel %vm980, %v985, %v986
        %v988 = vrot.slane %v885, 5
        %v989 = vrot.slane %v988, 4
        %v990 = vrot.slane %v886, 5
        %v991 = vsel %vm980, %v989, %v990
        %v992 = vrot.slane %v990, 4
        %v993 = vrot.slane %v887, 5
        %v994 = vsel %vm980, %v992, %v993
        %v995 = vrot.slane %v888, 5
        %v996 = vrot.slane %v995, 4
        %v997 = vrot.slane %v889, 5
        %v998 = vsel %vm980, %v996, %v997
        %v999 = vrot.slane %v997, 4
        %v1000 = vrot.slane %v890, 5
        %v1001 = vsel %vm980, %v999, %v1000
        %v1002 = vrot.slane %v891, 5
        %v1003 = vrot.slane %v1002, 4
        %v1004 = vrot.slane %v892, 5
        %v1005 = vsel %vm980, %v1003, %v1004
        %v1006 = vrot.slane %v1004, 4
        %v1007 = vrot.slane %v893, 5
        %v1008 = vsel %vm980, %v1006, %v1007
        %v1009 = vrot.slane %v894, 5
        %v1010 = vrot.slane %v1009, 4
        %v1011 = vrot.slane %v895, 5
        %v1012 = vsel %vm980, %v1010, %v1011
        %v1013 = vrot.slane %v1011, 4
        %v1014 = vrot.slane %v896, 5
        %v1015 = vsel %vm980, %v1013, %v1014
        %v1016 = vrot.slane %v897, 5
        %v1017 = vrot.slane %v1016, 4
        %v1018 = vrot.slane %v898, 5
        %v1019 = vsel %vm980, %v1017, %v1018
        %v1020 = vrot.slane %v1018, 4
        %v1021 = vrot.slane %v899, 5
        %v1022 = vsel %vm980, %v1020, %v1021
        %v1023 = vrot.slane %v900, 5
        %v1024 = vrot.slane %v1023, 4
        %v1025 = vrot.slane %v901, 5
        %v1026 = vsel %vm980, %v1024, %v1025
        %v1027 = vrot.slane %v1025, 4
        %v1028 = vrot.slane %v902, 5
        %v1029 = vsel %vm980, %v1027, %v1028
        %v1030 = vrot.slane %v903, 5
        %v1031 = vrot.slane %v1030, 4
        %v1032 = vrot.slane %v904, 5
        %v1033 = vsel %vm980, %v1031, %v1032
        %v1034 = vrot.slane %v1032, 4
        %v1035 = vrot.slane %v905, 5
        %v1036 = vsel %vm980, %v1034, %v1035
        %v1037 = vrot.slane %v906, 5
        %v1038 = vrot.slane %v1037, 4
        %v1039 = vrot.slane %v907, 5
        %v1040 = vsel %vm980, %v1038, %v1039
        %v1041 = vrot.slane %v1039, 4
        %v1042 = vrot.slane %v908, 5
        %v1043 = vsel %vm980, %v1041, %v1042
        %v1044 = vrot.slane %v909, 5
        %v1045 = vrot.slane %v1044, 4
        %v1046 = vrot.slane %v910, 5
        %v1047 = vsel %vm980, %v1045, %v1046
        %v1048 = vrot.slane %v1046, 4
        %v1049 = vrot.slane %v911, 5
        %v1050 = vsel %vm980, %v1048, %v1049
        %v1051 = vrot.slane %v912, 5
        %v1052 = vrot.slane %v1051, 4
        %v1053 = vrot.slane %v913, 5
        %v1054 = vsel %vm980, %v1052, %v1053
        %v1055 = vrot.slane %v1053, 4
        %v1056 = vrot.slane %v914, 5
        %v1057 = vsel %vm980, %v1055, %v1056
        %v1058 = vrot.slane %v915, 5
        %v1059 = vrot.slane %v1058, 4
        %v1060 = vrot.slane %v916, 5
        %v1061 = vsel %vm980, %v1059, %v1060
        %v1062 = vrot.slane %v1060, 4
        %v1063 = vrot.slane %v917, 5
        %v1064 = vsel %vm980, %v1062, %v1063
        %v1065 = vrot.slane %v918, 5
        %v1066 = vrot.slane %v1065, 4
        %v1067 = vrot.slane %v919, 5
        %v1068 = vsel %vm980, %v1066, %v1067
        %v1069 = vrot.slane %v1067, 4
        %v1070 = vrot.slane %v920, 5
        %v1071 = vsel %vm980, %v1069, %v1070
        %v1072 = vrot.slane %v921, 5
        %v1073 = vrot.slane %v1072, 4
        %v1074 = vrot.slane %v922, 5
        %v1075 = vsel %vm980, %v1073, %v1074
        %v1076 = vrot.slane %v1074, 4
        %v1077 = vrot.slane %v923, 5
        %v1078 = vsel %vm980, %v1076, %v1077
        %v1079 = vrot.slane %v924, 5
        %v1080 = vrot.slane %v1079, 4
        %v1081 = vrot.slane %v925, 5
        %v1082 = vsel %vm980, %v1080, %v1081
        %v1083 = vrot.slane %v1081, 4
        %v1084 = vrot.slane %v926, 5
        %v1085 = vsel %vm980, %v1083, %v1084
        %v1086 = vrot.slane %v927, 5
        %v1087 = vrot.slane %v1086, 4
        %v1088 = vrot.slane %v928, 5
        %v1089 = vsel %vm980, %v1087, %v1088
        %v1090 = vrot.slane %v1088, 4
        %v1091 = vrot.slane %v929, 5
        %v1092 = vsel %vm980, %v1090, %v1091
        %v1093 = vunpack.c.l.b16 %v984
        %v1094 = vunpack.c.l.b16 %v987
        %v1095 = vunpack.c.l.b16 %v991
        %v1096 = vunpack.c.l.b16 %v994
        %v1097 = vunpack.c.l.b16 %v998
        %v1098 = vunpack.c.l.b16 %v1001
        %v1099 = vunpack.c.l.b16 %v1005
        %v1100 = vunpack.c.l.b16 %v1008
        %v1101 = vunpack.c.l.b16 %v1012
        %v1102 = vunpack.c.l.b16 %v1015
        %v1103 = vunpack.c.l.b16 %v1019
        %v1104 = vunpack.c.l.b16 %v1022
        %v1105 = vunpack.c.l.b16 %v1026
        %v1106 = vunpack.c.l.b16 %v1029
        %v1107 = vunpack.c.l.b16 %v1033
        %v1108 = vunpack.c.l.b16 %v1036
        %v1109 = vunpack.c.l.b16 %v1040
        %v1110 = vunpack.c.l.b16 %v1043
        %v1111 = vunpack.c.l.b16 %v1047
        %v1112 = vunpack.c.l.b16 %v1050
        %v1113 = vunpack.c.l.b16 %v1054
        %v1114 = vunpack.c.l.b16 %v1057
        %v1115 = vunpack.c.l.b16 %v1061
        %v1116 = vunpack.c.l.b16 %v1064
        %v1117 = vunpack.c.l.b16 %v1068
        %v1118 = vunpack.c.l.b16 %v1071
        %v1119 = vunpack.c.l.b16 %v1075
        %v1120 = vunpack.c.l.b16 %v1078
        %v1121 = vunpack.c.l.b16 %v1082
        %v1122 = vunpack.c.l.b16 %v1085
        %v1123 = vunpack.c.l.b16 %v1089
        %v1124 = vunpack.c.l.b16 %v1092
        %v1125 = vpack.c.b16 %v1094, %v1093
        %v1126 = vpack.c.b16 %v1096, %v1095
        %v1127 = vpack.c.b16 %v1098, %v1097
        %v1128 = vpack.c.b16 %v1100, %v1099
        %v1129 = vpack.c.b16 %v1102, %v1101
        %v1130 = vpack.c.b16 %v1104, %v1103
        %v1131 = vpack.c.b16 %v1106, %v1105
        %v1132 = vpack.c.b16 %v1108, %v1107
        %v1133 = vpack.c.b16 %v1110, %v1109
        %v1134 = vpack.c.b16 %v1112, %v1111
        %v1135 = vpack.c.b16 %v1114, %v1113
        %v1136 = vpack.c.b16 %v1116, %v1115
        %v1137 = vpack.c.b16 %v1118, %v1117
        %v1138 = vpack.c.b16 %v1120, %v1119
        %v1139 = vpack.c.b16 %v1122, %v1121
        %v1140 = vpack.c.b16 %v1124, %v1123
        %1141 = vrot.lane.b32.xlu0 %v1125, 8
        %v1142 = vpop.permute.xlu0 %1141
        %1143 = vrot.lane.b32.xlu0 %v1126, 8
        %v1144 = vpop.permute.xlu0 %1143
        %1145 = vrot.lane.b32.xlu0 %v1127, 8
        %v1146 = vpop.permute.xlu0 %1145
        %1147 = vrot.lane.b32.xlu0 %v1128, 8
        %v1148 = vpop.permute.xlu0 %1147
        %1149 = vrot.lane.b32.xlu0 %v1129, 8
        %v1150 = vpop.permute.xlu0 %1149
        %1151 = vrot.lane.b32.xlu0 %v1130, 8
        %v1152 = vpop.permute.xlu0 %1151
        %1153 = vrot.lane.b32.xlu0 %v1131, 8
        %v1154 = vpop.permute.xlu0 %1153
        %1155 = vrot.lane.b32.xlu0 %v1132, 8
        %v1156 = vpop.permute.xlu0 %1155
        %1157 = vrot.lane.b32.xlu0 %v1133, 8
        %v1158 = vpop.permute.xlu0 %1157
        %1159 = vrot.lane.b32.xlu0 %v1134, 8
        %v1160 = vpop.permute.xlu0 %1159
        %1161 = vrot.lane.b32.xlu0 %v1135, 8
        %v1162 = vpop.permute.xlu0 %1161
        %1163 = vrot.lane.b32.xlu0 %v1136, 8
        %v1164 = vpop.permute.xlu0 %1163
        %1165 = vrot.lane.b32.xlu0 %v1137, 8
        %v1166 = vpop.permute.xlu0 %1165
        %1167 = vrot.lane.b32.xlu0 %v1138, 8
        %v1168 = vpop.permute.xlu0 %1167
        %1169 = vrot.lane.b32.xlu0 %v1139, 8
        %v1170 = vpop.permute.xlu0 %1169
        %1171 = vrot.lane.b32.xlu0 %v1140, 8
        %v1172 = vpop.permute.xlu0 %1171
        %vm1189 = vcmask 97344
        %1190 = vst.msk [vmem:[#allocation2] sm:$0xff] %vm1189, %v1142
        %1191 = vst.msk [vmem:[#allocation2 + $0x8] sm:$0xff] %vm1189, %v1144
        %1192 = vst.msk [vmem:[#allocation2 + $0x10] sm:$0xff] %vm1189, %v1146
        %1193 = vst.msk [vmem:[#allocation2 + $0x18] sm:$0xff] %vm1189, %v1148
        %1194 = vst.msk [vmem:[#allocation2 + $0x20] sm:$0xff] %vm1189, %v1150
        %1195 = vst.msk [vmem:[#allocation2 + $0x28] sm:$0xff] %vm1189, %v1152
        %1196 = vst.msk [vmem:[#allocation2 + $0x30] sm:$0xff] %vm1189, %v1154
        %1197 = vst.msk [vmem:[#allocation2 + $0x38] sm:$0xff] %vm1189, %v1156
        %1198 = vst.msk [vmem:[#allocation2 + $0x40] sm:$0xff] %vm1189, %v1158
        %1199 = vst.msk [vmem:[#allocation2 + $0x48] sm:$0xff] %vm1189, %v1160
        %1200 = vst.msk [vmem:[#allocation2 + $0x50] sm:$0xff] %vm1189, %v1162
        %1201 = vst.msk [vmem:[#allocation2 + $0x58] sm:$0xff] %vm1189, %v1164
        %1202 = vst.msk [vmem:[#allocation2 + $0x60] sm:$0xff] %vm1189, %v1166
        %1203 = vst.msk [vmem:[#allocation2 + $0x68] sm:$0xff] %vm1189, %v1168
        %1204 = vst.msk [vmem:[#allocation2 + $0x70] sm:$0xff] %vm1189, %v1170
        %1205 = vst.msk [vmem:[#allocation2 + $0x78] sm:$0xff] %vm1189, %v1172
        %s1206 = sadd.s32 %s185, 1
        %s1207 = smul.u32 %s1206, 3
        %s1208 = smul.addr %s1207, 4
        %s1209 = scalar_lea.vmem %s182, %s1208
        %v1210 = vld [vmem:[%s1209] sm:$0xf]
        %v1211 = vld [vmem:[%s1209 + $0x4] sm:$0xf]
        %v1212 = vld [vmem:[%s1209 + $0xc] sm:$0xf]
        %v1213 = vld [vmem:[%s1209 + $0x10] sm:$0xf]
        %v1214 = vld [vmem:[%s1209 + $0x18] sm:$0xf]
        %v1215 = vld [vmem:[%s1209 + $0x1c] sm:$0xf]
        %v1216 = vld [vmem:[%s1209 + $0x24] sm:$0xf]
        %v1217 = vld [vmem:[%s1209 + $0x28] sm:$0xf]
        %v1218 = vld [vmem:[%s1209 + $0x30] sm:$0xf]
        %v1219 = vld [vmem:[%s1209 + $0x34] sm:$0xf]
        %v1220 = vld [vmem:[%s1209 + $0x3c] sm:$0xf]
        %v1221 = vld [vmem:[%s1209 + $0x40] sm:$0xf]
        %v1222 = vld [vmem:[%s1209 + $0x48] sm:$0xf]
        %v1223 = vld [vmem:[%s1209 + $0x4c] sm:$0xf]
        %v1224 = vld [vmem:[%s1209 + $0x54] sm:$0xf]
        %v1225 = vld [vmem:[%s1209 + $0x58] sm:$0xf]
        %v1226 = vld [vmem:[%s1209 + $0x60] sm:$0xf]
        %v1227 = vld [vmem:[%s1209 + $0x64] sm:$0xf]
        %v1228 = vld [vmem:[%s1209 + $0x6c] sm:$0xf]
        %v1229 = vld [vmem:[%s1209 + $0x70] sm:$0xf]
        %v1230 = vld [vmem:[%s1209 + $0x78] sm:$0xf]
        %v1231 = vld [vmem:[%s1209 + $0x7c] sm:$0xf]
        %v1232 = vld [vmem:[%s1209 + $0x84] sm:$0xf]
        %v1233 = vld [vmem:[%s1209 + $0x88] sm:$0xf]
        %v1234 = vld [vmem:[%s1209 + $0x90] sm:$0xf]
        %v1235 = vld [vmem:[%s1209 + $0x94] sm:$0xf]
        %v1236 = vld [vmem:[%s1209 + $0x9c] sm:$0xf]
        %v1237 = vld [vmem:[%s1209 + $0xa0] sm:$0xf]
        %v1238 = vld [vmem:[%s1209 + $0xa8] sm:$0xf]
        %v1239 = vld [vmem:[%s1209 + $0xac] sm:$0xf]
        %v1240 = vld [vmem:[%s1209 + $0xb4] sm:$0xf]
        %v1241 = vld [vmem:[%s1209 + $0xb8] sm:$0xf]
        %v1274 = vunpack.c.l.b16 %v1210
        %v1275 = vunpack.c.l.b16 %v1211
        %v1276 = vunpack.c.l.b16 %v1212
        %v1277 = vunpack.c.l.b16 %v1213
        %v1278 = vunpack.c.l.b16 %v1214
        %v1279 = vunpack.c.l.b16 %v1215
        %v1280 = vunpack.c.l.b16 %v1216
        %v1281 = vunpack.c.l.b16 %v1217
        %v1282 = vunpack.c.l.b16 %v1218
        %v1283 = vunpack.c.l.b16 %v1219
        %v1284 = vunpack.c.l.b16 %v1220
        %v1285 = vunpack.c.l.b16 %v1221
        %v1286 = vunpack.c.l.b16 %v1222
        %v1287 = vunpack.c.l.b16 %v1223
        %v1288 = vunpack.c.l.b16 %v1224
        %v1289 = vunpack.c.l.b16 %v1225
        %v1290 = vunpack.c.l.b16 %v1226
        %v1291 = vunpack.c.l.b16 %v1227
        %v1292 = vunpack.c.l.b16 %v1228
        %v1293 = vunpack.c.l.b16 %v1229
        %v1294 = vunpack.c.l.b16 %v1230
        %v1295 = vunpack.c.l.b16 %v1231
        %v1296 = vunpack.c.l.b16 %v1232
        %v1297 = vunpack.c.l.b16 %v1233
        %v1298 = vunpack.c.l.b16 %v1234
        %v1299 = vunpack.c.l.b16 %v1235
        %v1300 = vunpack.c.l.b16 %v1236
        %v1301 = vunpack.c.l.b16 %v1237
        %v1302 = vunpack.c.l.b16 %v1238
        %v1303 = vunpack.c.l.b16 %v1239
        %v1304 = vunpack.c.l.b16 %v1240
        %v1305 = vunpack.c.l.b16 %v1241
        %v1306 = vpack.c.b16 %v1275, %v1274
        %v1307 = vpack.c.b16 %v1277, %v1276
        %v1308 = vpack.c.b16 %v1279, %v1278
        %v1309 = vpack.c.b16 %v1281, %v1280
        %v1310 = vpack.c.b16 %v1283, %v1282
        %v1311 = vpack.c.b16 %v1285, %v1284
        %v1312 = vpack.c.b16 %v1287, %v1286
        %v1313 = vpack.c.b16 %v1289, %v1288
        %v1314 = vpack.c.b16 %v1291, %v1290
        %v1315 = vpack.c.b16 %v1293, %v1292
        %v1316 = vpack.c.b16 %v1295, %v1294
        %v1317 = vpack.c.b16 %v1297, %v1296
        %v1318 = vpack.c.b16 %v1299, %v1298
        %v1319 = vpack.c.b16 %v1301, %v1300
        %v1320 = vpack.c.b16 %v1303, %v1302
        %v1321 = vpack.c.b16 %v1305, %v1304
        %1322 = vrot.lane.b32.xlu0 %v1306, 12
        %v1323 = vpop.permute.xlu0 %1322
        %1324 = vrot.lane.b32.xlu0 %v1307, 12
        %v1325 = vpop.permute.xlu0 %1324
        %1326 = vrot.lane.b32.xlu0 %v1308, 12
        %v1327 = vpop.permute.xlu0 %1326
        %1328 = vrot.lane.b32.xlu0 %v1309, 12
        %v1329 = vpop.permute.xlu0 %1328
        %1330 = vrot.lane.b32.xlu0 %v1310, 12
        %v1331 = vpop.permute.xlu0 %1330
        %1332 = vrot.lane.b32.xlu0 %v1311, 12
        %v1333 = vpop.permute.xlu0 %1332
        %1334 = vrot.lane.b32.xlu0 %v1312, 12
        %v1335 = vpop.permute.xlu0 %1334
        %1336 = vrot.lane.b32.xlu0 %v1313, 12
        %v1337 = vpop.permute.xlu0 %1336
        %1338 = vrot.lane.b32.xlu0 %v1314, 12
        %v1339 = vpop.permute.xlu0 %1338
        %1340 = vrot.lane.b32.xlu0 %v1315, 12
        %v1341 = vpop.permute.xlu0 %1340
        %1342 = vrot.lane.b32.xlu0 %v1316, 12
        %v1343 = vpop.permute.xlu0 %1342
        %1344 = vrot.lane.b32.xlu0 %v1317, 12
        %v1345 = vpop.permute.xlu0 %1344
        %1346 = vrot.lane.b32.xlu0 %v1318, 12
        %v1347 = vpop.permute.xlu0 %1346
        %1348 = vrot.lane.b32.xlu0 %v1319, 12
        %v1349 = vpop.permute.xlu0 %1348
        %1350 = vrot.lane.b32.xlu0 %v1320, 12
        %v1351 = vpop.permute.xlu0 %1350
        %1352 = vrot.lane.b32.xlu0 %v1321, 12
        %v1353 = vpop.permute.xlu0 %1352
        %vm1370 = vcmask 130144
        %1371 = vst.msk [vmem:[#allocation2] sm:$0xff] %vm1370, %v1323
        %1372 = vst.msk [vmem:[#allocation2 + $0x8] sm:$0xff] %vm1370, %v1325
        %1373 = vst.msk [vmem:[#allocation2 + $0x10] sm:$0xff] %vm1370, %v1327
        %1374 = vst.msk [vmem:[#allocation2 + $0x18] sm:$0xff] %vm1370, %v1329
        %1375 = vst.msk [vmem:[#allocation2 + $0x20] sm:$0xff] %vm1370, %v1331
        %1376 = vst.msk [vmem:[#allocation2 + $0x28] sm:$0xff] %vm1370, %v1333
        %1377 = vst.msk [vmem:[#allocation2 + $0x30] sm:$0xff] %vm1370, %v1335
        %1378 = vst.msk [vmem:[#allocation2 + $0x38] sm:$0xff] %vm1370, %v1337
        %1379 = vst.msk [vmem:[#allocation2 + $0x40] sm:$0xff] %vm1370, %v1339
        %1380 = vst.msk [vmem:[#allocation2 + $0x48] sm:$0xff] %vm1370, %v1341
        %1381 = vst.msk [vmem:[#allocation2 + $0x50] sm:$0xff] %vm1370, %v1343
        %1382 = vst.msk [vmem:[#allocation2 + $0x58] sm:$0xff] %vm1370, %v1345
        %1383 = vst.msk [vmem:[#allocation2 + $0x60] sm:$0xff] %vm1370, %v1347
        %1384 = vst.msk [vmem:[#allocation2 + $0x68] sm:$0xff] %vm1370, %v1349
        %1385 = vst.msk [vmem:[#allocation2 + $0x70] sm:$0xff] %vm1370, %v1351
        %1386 = vst.msk [vmem:[#allocation2 + $0x78] sm:$0xff] %vm1370, %v1353
        %v1387 = vld [vmem:[%s1209] sm:$0xf]
        %v1388 = vld [vmem:[%s1209 + $0x4] sm:$0xf]
        %v1389 = vld [vmem:[%s1209 + $0x8] sm:$0x1]
        %v1390 = vld [vmem:[%s1209 + $0xc] sm:$0xf]
        %v1391 = vld [vmem:[%s1209 + $0x10] sm:$0xf]
        %v1392 = vld [vmem:[%s1209 + $0x14] sm:$0x1]
        %v1393 = vld [vmem:[%s1209 + $0x18] sm:$0xf]
        %v1394 = vld [vmem:[%s1209 + $0x1c] sm:$0xf]
        %v1395 = vld [vmem:[%s1209 + $0x20] sm:$0x1]
        %v1396 = vld [vmem:[%s1209 + $0x24] sm:$0xf]
        %v1397 = vld [vmem:[%s1209 + $0x28] sm:$0xf]
        %v1398 = vld [vmem:[%s1209 + $0x2c] sm:$0x1]
        %v1399 = vld [vmem:[%s1209 + $0x30] sm:$0xf]
        %v1400 = vld [vmem:[%s1209 + $0x34] sm:$0xf]
        %v1401 = vld [vmem:[%s1209 + $0x38] sm:$0x1]
        %v1402 = vld [vmem:[%s1209 + $0x3c] sm:$0xf]
        %v1403 = vld [vmem:[%s1209 + $0x40] sm:$0xf]
        %v1404 = vld [vmem:[%s1209 + $0x44] sm:$0x1]
        %v1405 = vld [vmem:[%s1209 + $0x48] sm:$0xf]
        %v1406 = vld [vmem:[%s1209 + $0x4c] sm:$0xf]
        %v1407 = vld [vmem:[%s1209 + $0x50] sm:$0x1]
        %v1408 = vld [vmem:[%s1209 + $0x54] sm:$0xf]
        %v1409 = vld [vmem:[%s1209 + $0x58] sm:$0xf]
        %v1410 = vld [vmem:[%s1209 + $0x5c] sm:$0x1]
        %v1411 = vld [vmem:[%s1209 + $0x60] sm:$0xf]
        %v1412 = vld [vmem:[%s1209 + $0x64] sm:$0xf]
        %v1413 = vld [vmem:[%s1209 + $0x68] sm:$0x1]
        %v1414 = vld [vmem:[%s1209 + $0x6c] sm:$0xf]
        %v1415 = vld [vmem:[%s1209 + $0x70] sm:$0xf]
        %v1416 = vld [vmem:[%s1209 + $0x74] sm:$0x1]
        %v1417 = vld [vmem:[%s1209 + $0x78] sm:$0xf]
        %v1418 = vld [vmem:[%s1209 + $0x7c] sm:$0xf]
        %v1419 = vld [vmem:[%s1209 + $0x80] sm:$0x1]
        %v1420 = vld [vmem:[%s1209 + $0x84] sm:$0xf]
        %v1421 = vld [vmem:[%s1209 + $0x88] sm:$0xf]
        %v1422 = vld [vmem:[%s1209 + $0x8c] sm:$0x1]
        %v1423 = vld [vmem:[%s1209 + $0x90] sm:$0xf]
        %v1424 = vld [vmem:[%s1209 + $0x94] sm:$0xf]
        %v1425 = vld [vmem:[%s1209 + $0x98] sm:$0x1]
        %v1426 = vld [vmem:[%s1209 + $0x9c] sm:$0xf]
        %v1427 = vld [vmem:[%s1209 + $0xa0] sm:$0xf]
        %v1428 = vld [vmem:[%s1209 + $0xa4] sm:$0x1]
        %v1429 = vld [vmem:[%s1209 + $0xa8] sm:$0xf]
        %v1430 = vld [vmem:[%s1209 + $0xac] sm:$0xf]
        %v1431 = vld [vmem:[%s1209 + $0xb0] sm:$0x1]
        %v1432 = vld [vmem:[%s1209 + $0xb4] sm:$0xf]
        %v1433 = vld [vmem:[%s1209 + $0xb8] sm:$0xf]
        %v1434 = vld [vmem:[%s1209 + $0xbc] sm:$0x1]
        %v1436 = vshrl.u32 %v1387, 16
        %v1438 = vrot.slane %v1436, 4
        %v1439 = vshll.u32 %v1387, 16
        %v1441 = vrot.slane %v1439, 5
        %v1442 = vor.u32 %v1438, %v1441
        %v1443 = vrot.slane %v1442, 4
        %v1445 = vshll.u32 %v1388, 16
        %v1447 = vrot.slane %v1445, 5
        %v1448 = vsel %vm384, %v1443, %v1447
        %v1449 = vshrl.u32 %v1388, 16
        %v1451 = vrot.slane %v1449, 4
        %v1452 = vor.u32 %v1451, %v1447
        %v1453 = vrot.slane %v1452, 4
        %v1455 = vshll.u32 %v1389, 16
        %v1457 = vrot.slane %v1455, 5
        %v1458 = vsel %vm384, %v1453, %v1457
        %v1460 = vshrl.u32 %v1390, 16
        %v1462 = vrot.slane %v1460, 4
        %v1463 = vshll.u32 %v1390, 16
        %v1465 = vrot.slane %v1463, 5
        %v1466 = vor.u32 %v1462, %v1465
        %v1467 = vrot.slane %v1466, 4
        %v1469 = vshll.u32 %v1391, 16
        %v1471 = vrot.slane %v1469, 5
        %v1472 = vsel %vm384, %v1467, %v1471
        %v1473 = vshrl.u32 %v1391, 16
        %v1475 = vrot.slane %v1473, 4
        %v1476 = vor.u32 %v1475, %v1471
        %v1477 = vrot.slane %v1476, 4
        %v1479 = vshll.u32 %v1392, 16
        %v1481 = vrot.slane %v1479, 5
        %v1482 = vsel %vm384, %v1477, %v1481
        %v1484 = vshrl.u32 %v1393, 16
        %v1486 = vrot.slane %v1484, 4
        %v1487 = vshll.u32 %v1393, 16
        %v1489 = vrot.slane %v1487, 5
        %v1490 = vor.u32 %v1486, %v1489
        %v1491 = vrot.slane %v1490, 4
        %v1493 = vshll.u32 %v1394, 16
        %v1495 = vrot.slane %v1493, 5
        %v1496 = vsel %vm384, %v1491, %v1495
        %v1497 = vshrl.u32 %v1394, 16
        %v1499 = vrot.slane %v1497, 4
        %v1500 = vor.u32 %v1499, %v1495
        %v1501 = vrot.slane %v1500, 4
        %v1503 = vshll.u32 %v1395, 16
        %v1505 = vrot.slane %v1503, 5
        %v1506 = vsel %vm384, %v1501, %v1505
        %v1508 = vshrl.u32 %v1396, 16
        %v1510 = vrot.slane %v1508, 4
        %v1511 = vshll.u32 %v1396, 16
        %v1513 = vrot.slane %v1511, 5
        %v1514 = vor.u32 %v1510, %v1513
        %v1515 = vrot.slane %v1514, 4
        %v1517 = vshll.u32 %v1397, 16
        %v1519 = vrot.slane %v1517, 5
        %v1520 = vsel %vm384, %v1515, %v1519
        %v1521 = vshrl.u32 %v1397, 16
        %v1523 = vrot.slane %v1521, 4
        %v1524 = vor.u32 %v1523, %v1519
        %v1525 = vrot.slane %v1524, 4
        %v1527 = vshll.u32 %v1398, 16
        %v1529 = vrot.slane %v1527, 5
        %v1530 = vsel %vm384, %v1525, %v1529
        %v1532 = vshrl.u32 %v1399, 16
        %v1534 = vrot.slane %v1532, 4
        %v1535 = vshll.u32 %v1399, 16
        %v1537 = vrot.slane %v1535, 5
        %v1538 = vor.u32 %v1534, %v1537
        %v1539 = vrot.slane %v1538, 4
        %v1541 = vshll.u32 %v1400, 16
        %v1543 = vrot.slane %v1541, 5
        %v1544 = vsel %vm384, %v1539, %v1543
        %v1545 = vshrl.u32 %v1400, 16
        %v1547 = vrot.slane %v1545, 4
        %v1548 = vor.u32 %v1547, %v1543
        %v1549 = vrot.slane %v1548, 4
        %v1551 = vshll.u32 %v1401, 16
        %v1553 = vrot.slane %v1551, 5
        %v1554 = vsel %vm384, %v1549, %v1553
        %v1556 = vshrl.u32 %v1402, 16
        %v1558 = vrot.slane %v1556, 4
        %v1559 = vshll.u32 %v1402, 16
        %v1561 = vrot.slane %v1559, 5
        %v1562 = vor.u32 %v1558, %v1561
        %v1563 = vrot.slane %v1562, 4
        %v1565 = vshll.u32 %v1403, 16
        %v1567 = vrot.slane %v1565, 5
        %v1568 = vsel %vm384, %v1563, %v1567
        %v1569 = vshrl.u32 %v1403, 16
        %v1571 = vrot.slane %v1569, 4
        %v1572 = vor.u32 %v1571, %v1567
        %v1573 = vrot.slane %v1572, 4
        %v1575 = vshll.u32 %v1404, 16
        %v1577 = vrot.slane %v1575, 5
        %v1578 = vsel %vm384, %v1573, %v1577
        %v1580 = vshrl.u32 %v1405, 16
        %v1582 = vrot.slane %v1580, 4
        %v1583 = vshll.u32 %v1405, 16
        %v1585 = vrot.slane %v1583, 5
        %v1586 = vor.u32 %v1582, %v1585
        %v1587 = vrot.slane %v1586, 4
        %v1589 = vshll.u32 %v1406, 16
        %v1591 = vrot.slane %v1589, 5
        %v1592 = vsel %vm384, %v1587, %v1591
        %v1593 = vshrl.u32 %v1406, 16
        %v1595 = vrot.slane %v1593, 4
        %v1596 = vor.u32 %v1595, %v1591
        %v1597 = vrot.slane %v1596, 4
        %v1599 = vshll.u32 %v1407, 16
        %v1601 = vrot.slane %v1599, 5
        %v1602 = vsel %vm384, %v1597, %v1601
        %v1604 = vshrl.u32 %v1408, 16
        %v1606 = vrot.slane %v1604, 4
        %v1607 = vshll.u32 %v1408, 16
        %v1609 = vrot.slane %v1607, 5
        %v1610 = vor.u32 %v1606, %v1609
        %v1611 = vrot.slane %v1610, 4
        %v1613 = vshll.u32 %v1409, 16
        %v1615 = vrot.slane %v1613, 5
        %v1616 = vsel %vm384, %v1611, %v1615
        %v1617 = vshrl.u32 %v1409, 16
        %v1619 = vrot.slane %v1617, 4
        %v1620 = vor.u32 %v1619, %v1615
        %v1621 = vrot.slane %v1620, 4
        %v1623 = vshll.u32 %v1410, 16
        %v1625 = vrot.slane %v1623, 5
        %v1626 = vsel %vm384, %v1621, %v1625
        %v1628 = vshrl.u32 %v1411, 16
        %v1630 = vrot.slane %v1628, 4
        %v1631 = vshll.u32 %v1411, 16
        %v1633 = vrot.slane %v1631, 5
        %v1634 = vor.u32 %v1630, %v1633
        %v1635 = vrot.slane %v1634, 4
        %v1637 = vshll.u32 %v1412, 16
        %v1639 = vrot.slane %v1637, 5
        %v1640 = vsel %vm384, %v1635, %v1639
        %v1641 = vshrl.u32 %v1412, 16
        %v1643 = vrot.slane %v1641, 4
        %v1644 = vor.u32 %v1643, %v1639
        %v1645 = vrot.slane %v1644, 4
        %v1647 = vshll.u32 %v1413, 16
        %v1649 = vrot.slane %v1647, 5
        %v1650 = vsel %vm384, %v1645, %v1649
        %v1652 = vshrl.u32 %v1414, 16
        %v1654 = vrot.slane %v1652, 4
        %v1655 = vshll.u32 %v1414, 16
        %v1657 = vrot.slane %v1655, 5
        %v1658 = vor.u32 %v1654, %v1657
        %v1659 = vrot.slane %v1658, 4
        %v1661 = vshll.u32 %v1415, 16
        %v1663 = vrot.slane %v1661, 5
        %v1664 = vsel %vm384, %v1659, %v1663
        %v1665 = vshrl.u32 %v1415, 16
        %v1667 = vrot.slane %v1665, 4
        %v1668 = vor.u32 %v1667, %v1663
        %v1669 = vrot.slane %v1668, 4
        %v1671 = vshll.u32 %v1416, 16
        %v1673 = vrot.slane %v1671, 5
        %v1674 = vsel %vm384, %v1669, %v1673
        %v1676 = vshrl.u32 %v1417, 16
        %v1678 = vrot.slane %v1676, 4
        %v1679 = vshll.u32 %v1417, 16
        %v1681 = vrot.slane %v1679, 5
        %v1682 = vor.u32 %v1678, %v1681
        %v1683 = vrot.slane %v1682, 4
        %v1685 = vshll.u32 %v1418, 16
        %v1687 = vrot.slane %v1685, 5
        %v1688 = vsel %vm384, %v1683, %v1687
        %v1689 = vshrl.u32 %v1418, 16
        %v1691 = vrot.slane %v1689, 4
        %v1692 = vor.u32 %v1691, %v1687
        %v1693 = vrot.slane %v1692, 4
        %v1695 = vshll.u32 %v1419, 16
        %v1697 = vrot.slane %v1695, 5
        %v1698 = vsel %vm384, %v1693, %v1697
        %v1700 = vshrl.u32 %v1420, 16
        %v1702 = vrot.slane %v1700, 4
        %v1703 = vshll.u32 %v1420, 16
        %v1705 = vrot.slane %v1703, 5
        %v1706 = vor.u32 %v1702, %v1705
        %v1707 = vrot.slane %v1706, 4
        %v1709 = vshll.u32 %v1421, 16
        %v1711 = vrot.slane %v1709, 5
        %v1712 = vsel %vm384, %v1707, %v1711
        %v1713 = vshrl.u32 %v1421, 16
        %v1715 = vrot.slane %v1713, 4
        %v1716 = vor.u32 %v1715, %v1711
        %v1717 = vrot.slane %v1716, 4
        %v1719 = vshll.u32 %v1422, 16
        %v1721 = vrot.slane %v1719, 5
        %v1722 = vsel %vm384, %v1717, %v1721
        %v1724 = vshrl.u32 %v1423, 16
        %v1726 = vrot.slane %v1724, 4
        %v1727 = vshll.u32 %v1423, 16
        %v1729 = vrot.slane %v1727, 5
        %v1730 = vor.u32 %v1726, %v1729
        %v1731 = vrot.slane %v1730, 4
        %v1733 = vshll.u32 %v1424, 16
        %v1735 = vrot.slane %v1733, 5
        %v1736 = vsel %vm384, %v1731, %v1735
        %v1737 = vshrl.u32 %v1424, 16
        %v1739 = vrot.slane %v1737, 4
        %v1740 = vor.u32 %v1739, %v1735
        %v1741 = vrot.slane %v1740, 4
        %v1743 = vshll.u32 %v1425, 16
        %v1745 = vrot.slane %v1743, 5
        %v1746 = vsel %vm384, %v1741, %v1745
        %v1748 = vshrl.u32 %v1426, 16
        %v1750 = vrot.slane %v1748, 4
        %v1751 = vshll.u32 %v1426, 16
        %v1753 = vrot.slane %v1751, 5
        %v1754 = vor.u32 %v1750, %v1753
        %v1755 = vrot.slane %v1754, 4
        %v1757 = vshll.u32 %v1427, 16
        %v1759 = vrot.slane %v1757, 5
        %v1760 = vsel %vm384, %v1755, %v1759
        %v1761 = vshrl.u32 %v1427, 16
        %v1763 = vrot.slane %v1761, 4
        %v1764 = vor.u32 %v1763, %v1759
        %v1765 = vrot.slane %v1764, 4
        %v1767 = vshll.u32 %v1428, 16
        %v1769 = vrot.slane %v1767, 5
        %v1770 = vsel %vm384, %v1765, %v1769
        %v1772 = vshrl.u32 %v1429, 16
        %v1774 = vrot.slane %v1772, 4
        %v1775 = vshll.u32 %v1429, 16
        %v1777 = vrot.slane %v1775, 5
        %v1778 = vor.u32 %v1774, %v1777
        %v1779 = vrot.slane %v1778, 4
        %v1781 = vshll.u32 %v1430, 16
        %v1783 = vrot.slane %v1781, 5
        %v1784 = vsel %vm384, %v1779, %v1783
        %v1785 = vshrl.u32 %v1430, 16
        %v1787 = vrot.slane %v1785, 4
        %v1788 = vor.u32 %v1787, %v1783
        %v1789 = vrot.slane %v1788, 4
        %v1791 = vshll.u32 %v1431, 16
        %v1793 = vrot.slane %v1791, 5
        %v1794 = vsel %vm384, %v1789, %v1793
        %v1796 = vshrl.u32 %v1432, 16
        %v1798 = vrot.slane %v1796, 4
        %v1799 = vshll.u32 %v1432, 16
        %v1801 = vrot.slane %v1799, 5
        %v1802 = vor.u32 %v1798, %v1801
        %v1803 = vrot.slane %v1802, 4
        %v1805 = vshll.u32 %v1433, 16
        %v1807 = vrot.slane %v1805, 5
        %v1808 = vsel %vm384, %v1803, %v1807
        %v1809 = vshrl.u32 %v1433, 16
        %v1811 = vrot.slane %v1809, 4
        %v1812 = vor.u32 %v1811, %v1807
        %v1813 = vrot.slane %v1812, 4
        %v1815 = vshll.u32 %v1434, 16
        %v1817 = vrot.slane %v1815, 5
        %v1818 = vsel %vm384, %v1813, %v1817
        %v1819 = vunpack.c.l.b16 %v1448
        %v1820 = vunpack.c.l.b16 %v1458
        %v1821 = vunpack.c.l.b16 %v1472
        %v1822 = vunpack.c.l.b16 %v1482
        %v1823 = vunpack.c.l.b16 %v1496
        %v1824 = vunpack.c.l.b16 %v1506
        %v1825 = vunpack.c.l.b16 %v1520
        %v1826 = vunpack.c.l.b16 %v1530
        %v1827 = vunpack.c.l.b16 %v1544
        %v1828 = vunpack.c.l.b16 %v1554
        %v1829 = vunpack.c.l.b16 %v1568
        %v1830 = vunpack.c.l.b16 %v1578
        %v1831 = vunpack.c.l.b16 %v1592
        %v1832 = vunpack.c.l.b16 %v1602
        %v1833 = vunpack.c.l.b16 %v1616
        %v1834 = vunpack.c.l.b16 %v1626
        %v1835 = vunpack.c.l.b16 %v1640
        %v1836 = vunpack.c.l.b16 %v1650
        %v1837 = vunpack.c.l.b16 %v1664
        %v1838 = vunpack.c.l.b16 %v1674
        %v1839 = vunpack.c.l.b16 %v1688
        %v1840 = vunpack.c.l.b16 %v1698
        %v1841 = vunpack.c.l.b16 %v1712
        %v1842 = vunpack.c.l.b16 %v1722
        %v1843 = vunpack.c.l.b16 %v1736
        %v1844 = vunpack.c.l.b16 %v1746
        %v1845 = vunpack.c.l.b16 %v1760
        %v1846 = vunpack.c.l.b16 %v1770
        %v1847 = vunpack.c.l.b16 %v1784
        %v1848 = vunpack.c.l.b16 %v1794
        %v1849 = vunpack.c.l.b16 %v1808
        %v1850 = vunpack.c.l.b16 %v1818
        %v1851 = vpack.c.b16 %v1820, %v1819
        %v1852 = vpack.c.b16 %v1822, %v1821
        %v1853 = vpack.c.b16 %v1824, %v1823
        %v1854 = vpack.c.b16 %v1826, %v1825
        %v1855 = vpack.c.b16 %v1828, %v1827
        %v1856 = vpack.c.b16 %v1830, %v1829
        %v1857 = vpack.c.b16 %v1832, %v1831
        %v1858 = vpack.c.b16 %v1834, %v1833
        %v1859 = vpack.c.b16 %v1836, %v1835
        %v1860 = vpack.c.b16 %v1838, %v1837
        %v1861 = vpack.c.b16 %v1840, %v1839
        %v1862 = vpack.c.b16 %v1842, %v1841
        %v1863 = vpack.c.b16 %v1844, %v1843
        %v1864 = vpack.c.b16 %v1846, %v1845
        %v1865 = vpack.c.b16 %v1848, %v1847
        %v1866 = vpack.c.b16 %v1850, %v1849
        %1867 = vrot.lane.b32.xlu0 %v1851, 16
        %v1868 = vpop.permute.xlu0 %1867
        %1869 = vrot.lane.b32.xlu0 %v1852, 16
        %v1870 = vpop.permute.xlu0 %1869
        %1871 = vrot.lane.b32.xlu0 %v1853, 16
        %v1872 = vpop.permute.xlu0 %1871
        %1873 = vrot.lane.b32.xlu0 %v1854, 16
        %v1874 = vpop.permute.xlu0 %1873
        %1875 = vrot.lane.b32.xlu0 %v1855, 16
        %v1876 = vpop.permute.xlu0 %1875
        %1877 = vrot.lane.b32.xlu0 %v1856, 16
        %v1878 = vpop.permute.xlu0 %1877
        %1879 = vrot.lane.b32.xlu0 %v1857, 16
        %v1880 = vpop.permute.xlu0 %1879
        %1881 = vrot.lane.b32.xlu0 %v1858, 16
        %v1882 = vpop.permute.xlu0 %1881
        %1883 = vrot.lane.b32.xlu0 %v1859, 16
        %v1884 = vpop.permute.xlu0 %1883
        %1885 = vrot.lane.b32.xlu0 %v1860, 16
        %v1886 = vpop.permute.xlu0 %1885
        %1887 = vrot.lane.b32.xlu0 %v1861, 16
        %v1888 = vpop.permute.xlu0 %1887
        %1889 = vrot.lane.b32.xlu0 %v1862, 16
        %v1890 = vpop.permute.xlu0 %1889
        %1891 = vrot.lane.b32.xlu0 %v1863, 16
        %v1892 = vpop.permute.xlu0 %1891
        %1893 = vrot.lane.b32.xlu0 %v1864, 16
        %v1894 = vpop.permute.xlu0 %1893
        %1895 = vrot.lane.b32.xlu0 %v1865, 16
        %v1896 = vpop.permute.xlu0 %1895
        %1897 = vrot.lane.b32.xlu0 %v1866, 16
        %v1898 = vpop.permute.xlu0 %1897
        %vm1915 = vcmask 162944
        %1916 = vst.msk [vmem:[#allocation2] sm:$0xff] %vm1915, %v1868
        %1917 = vst.msk [vmem:[#allocation2 + $0x8] sm:$0xff] %vm1915, %v1870
        %1918 = vst.msk [vmem:[#allocation2 + $0x10] sm:$0xff] %vm1915, %v1872
        %1919 = vst.msk [vmem:[#allocation2 + $0x18] sm:$0xff] %vm1915, %v1874
        %1920 = vst.msk [vmem:[#allocation2 + $0x20] sm:$0xff] %vm1915, %v1876
        %1921 = vst.msk [vmem:[#allocation2 + $0x28] sm:$0xff] %vm1915, %v1878
        %1922 = vst.msk [vmem:[#allocation2 + $0x30] sm:$0xff] %vm1915, %v1880
        %1923 = vst.msk [vmem:[#allocation2 + $0x38] sm:$0xff] %vm1915, %v1882
        %1924 = vst.msk [vmem:[#allocation2 + $0x40] sm:$0xff] %vm1915, %v1884
        %1925 = vst.msk [vmem:[#allocation2 + $0x48] sm:$0xff] %vm1915, %v1886
        %1926 = vst.msk [vmem:[#allocation2 + $0x50] sm:$0xff] %vm1915, %v1888
        %1927 = vst.msk [vmem:[#allocation2 + $0x58] sm:$0xff] %vm1915, %v1890
        %1928 = vst.msk [vmem:[#allocation2 + $0x60] sm:$0xff] %vm1915, %v1892
        %1929 = vst.msk [vmem:[#allocation2 + $0x68] sm:$0xff] %vm1915, %v1894
        %1930 = vst.msk [vmem:[#allocation2 + $0x70] sm:$0xff] %vm1915, %v1896
        %1931 = vst.msk [vmem:[#allocation2 + $0x78] sm:$0xff] %vm1915, %v1898
        %v1932 = vld [vmem:[%s1209] sm:$0xe]
        %v1933 = vld [vmem:[%s1209 + $0x4] sm:$0xf]
        %v1934 = vld [vmem:[%s1209 + $0x8] sm:$0x1]
        %v1935 = vld [vmem:[%s1209 + $0xc] sm:$0xe]
        %v1936 = vld [vmem:[%s1209 + $0x10] sm:$0xf]
        %v1937 = vld [vmem:[%s1209 + $0x14] sm:$0x1]
        %v1938 = vld [vmem:[%s1209 + $0x18] sm:$0xe]
        %v1939 = vld [vmem:[%s1209 + $0x1c] sm:$0xf]
        %v1940 = vld [vmem:[%s1209 + $0x20] sm:$0x1]
        %v1941 = vld [vmem:[%s1209 + $0x24] sm:$0xe]
        %v1942 = vld [vmem:[%s1209 + $0x28] sm:$0xf]
        %v1943 = vld [vmem:[%s1209 + $0x2c] sm:$0x1]
        %v1944 = vld [vmem:[%s1209 + $0x30] sm:$0xe]
        %v1945 = vld [vmem:[%s1209 + $0x34] sm:$0xf]
        %v1946 = vld [vmem:[%s1209 + $0x38] sm:$0x1]
        %v1947 = vld [vmem:[%s1209 + $0x3c] sm:$0xe]
        %v1948 = vld [vmem:[%s1209 + $0x40] sm:$0xf]
        %v1949 = vld [vmem:[%s1209 + $0x44] sm:$0x1]
        %v1950 = vld [vmem:[%s1209 + $0x48] sm:$0xe]
        %v1951 = vld [vmem:[%s1209 + $0x4c] sm:$0xf]
        %v1952 = vld [vmem:[%s1209 + $0x50] sm:$0x1]
        %v1953 = vld [vmem:[%s1209 + $0x54] sm:$0xe]
        %v1954 = vld [vmem:[%s1209 + $0x58] sm:$0xf]
        %v1955 = vld [vmem:[%s1209 + $0x5c] sm:$0x1]
        %v1956 = vld [vmem:[%s1209 + $0x60] sm:$0xe]
        %v1957 = vld [vmem:[%s1209 + $0x64] sm:$0xf]
        %v1958 = vld [vmem:[%s1209 + $0x68] sm:$0x1]
        %v1959 = vld [vmem:[%s1209 + $0x6c] sm:$0xe]
        %v1960 = vld [vmem:[%s1209 + $0x70] sm:$0xf]
        %v1961 = vld [vmem:[%s1209 + $0x74] sm:$0x1]
        %v1962 = vld [vmem:[%s1209 + $0x78] sm:$0xe]
        %v1963 = vld [vmem:[%s1209 + $0x7c] sm:$0xf]
        %v1964 = vld [vmem:[%s1209 + $0x80] sm:$0x1]
        %v1965 = vld [vmem:[%s1209 + $0x84] sm:$0xe]
        %v1966 = vld [vmem:[%s1209 + $0x88] sm:$0xf]
        %v1967 = vld [vmem:[%s1209 + $0x8c] sm:$0x1]
        %v1968 = vld [vmem:[%s1209 + $0x90] sm:$0xe]
        %v1969 = vld [vmem:[%s1209 + $0x94] sm:$0xf]
        %v1970 = vld [vmem:[%s1209 + $0x98] sm:$0x1]
        %v1971 = vld [vmem:[%s1209 + $0x9c] sm:$0xe]
        %v1972 = vld [vmem:[%s1209 + $0xa0] sm:$0xf]
        %v1973 = vld [vmem:[%s1209 + $0xa4] sm:$0x1]
        %v1974 = vld [vmem:[%s1209 + $0xa8] sm:$0xe]
        %v1975 = vld [vmem:[%s1209 + $0xac] sm:$0xf]
        %v1976 = vld [vmem:[%s1209 + $0xb0] sm:$0x1]
        %v1977 = vld [vmem:[%s1209 + $0xb4] sm:$0xe]
        %v1978 = vld [vmem:[%s1209 + $0xb8] sm:$0xf]
        %v1979 = vld [vmem:[%s1209 + $0xbc] sm:$0x1]
        %v2028 = vrot.slane %v1932, 5
        %v2029 = vrot.slane %v2028, 4
        %v2030 = vrot.slane %v1933, 5
        %v2031 = vsel %vm980, %v2029, %v2030
        %v2032 = vrot.slane %v2030, 4
        %v2033 = vrot.slane %v1934, 5
        %v2034 = vsel %vm980, %v2032, %v2033
        %v2035 = vrot.slane %v1935, 5
        %v2036 = vrot.slane %v2035, 4
        %v2037 = vrot.slane %v1936, 5
        %v2038 = vsel %vm980, %v2036, %v2037
        %v2039 = vrot.slane %v2037, 4
        %v2040 = vrot.slane %v1937, 5
        %v2041 = vsel %vm980, %v2039, %v2040
        %v2042 = vrot.slane %v1938, 5
        %v2043 = vrot.slane %v2042, 4
        %v2044 = vrot.slane %v1939, 5
        %v2045 = vsel %vm980, %v2043, %v2044
        %v2046 = vrot.slane %v2044, 4
        %v2047 = vrot.slane %v1940, 5
        %v2048 = vsel %vm980, %v2046, %v2047
        %v2049 = vrot.slane %v1941, 5
        %v2050 = vrot.slane %v2049, 4
        %v2051 = vrot.slane %v1942, 5
        %v2052 = vsel %vm980, %v2050, %v2051
        %v2053 = vrot.slane %v2051, 4
        %v2054 = vrot.slane %v1943, 5
        %v2055 = vsel %vm980, %v2053, %v2054
        %v2056 = vrot.slane %v1944, 5
        %v2057 = vrot.slane %v2056, 4
        %v2058 = vrot.slane %v1945, 5
        %v2059 = vsel %vm980, %v2057, %v2058
        %v2060 = vrot.slane %v2058, 4
        %v2061 = vrot.slane %v1946, 5
        %v2062 = vsel %vm980, %v2060, %v2061
        %v2063 = vrot.slane %v1947, 5
        %v2064 = vrot.slane %v2063, 4
        %v2065 = vrot.slane %v1948, 5
        %v2066 = vsel %vm980, %v2064, %v2065
        %v2067 = vrot.slane %v2065, 4
        %v2068 = vrot.slane %v1949, 5
        %v2069 = vsel %vm980, %v2067, %v2068
        %v2070 = vrot.slane %v1950, 5
        %v2071 = vrot.slane %v2070, 4
        %v2072 = vrot.slane %v1951, 5
        %v2073 = vsel %vm980, %v2071, %v2072
        %v2074 = vrot.slane %v2072, 4
        %v2075 = vrot.slane %v1952, 5
        %v2076 = vsel %vm980, %v2074, %v2075
        %v2077 = vrot.slane %v1953, 5
        %v2078 = vrot.slane %v2077, 4
        %v2079 = vrot.slane %v1954, 5
        %v2080 = vsel %vm980, %v2078, %v2079
        %v2081 = vrot.slane %v2079, 4
        %v2082 = vrot.slane %v1955, 5
        %v2083 = vsel %vm980, %v2081, %v2082
        %v2084 = vrot.slane %v1956, 5
        %v2085 = vrot.slane %v2084, 4
        %v2086 = vrot.slane %v1957, 5
        %v2087 = vsel %vm980, %v2085, %v2086
        %v2088 = vrot.slane %v2086, 4
        %v2089 = vrot.slane %v1958, 5
        %v2090 = vsel %vm980, %v2088, %v2089
        %v2091 = vrot.slane %v1959, 5
        %v2092 = vrot.slane %v2091, 4
        %v2093 = vrot.slane %v1960, 5
        %v2094 = vsel %vm980, %v2092, %v2093
        %v2095 = vrot.slane %v2093, 4
        %v2096 = vrot.slane %v1961, 5
        %v2097 = vsel %vm980, %v2095, %v2096
        %v2098 = vrot.slane %v1962, 5
        %v2099 = vrot.slane %v2098, 4
        %v2100 = vrot.slane %v1963, 5
        %v2101 = vsel %vm980, %v2099, %v2100
        %v2102 = vrot.slane %v2100, 4
        %v2103 = vrot.slane %v1964, 5
        %v2104 = vsel %vm980, %v2102, %v2103
        %v2105 = vrot.slane %v1965, 5
        %v2106 = vrot.slane %v2105, 4
        %v2107 = vrot.slane %v1966, 5
        %v2108 = vsel %vm980, %v2106, %v2107
        %v2109 = vrot.slane %v2107, 4
        %v2110 = vrot.slane %v1967, 5
        %v2111 = vsel %vm980, %v2109, %v2110
        %v2112 = vrot.slane %v1968, 5
        %v2113 = vrot.slane %v2112, 4
        %v2114 = vrot.slane %v1969, 5
        %v2115 = vsel %vm980, %v2113, %v2114
        %v2116 = vrot.slane %v2114, 4
        %v2117 = vrot.slane %v1970, 5
        %v2118 = vsel %vm980, %v2116, %v2117
        %v2119 = vrot.slane %v1971, 5
        %v2120 = vrot.slane %v2119, 4
        %v2121 = vrot.slane %v1972, 5
        %v2122 = vsel %vm980, %v2120, %v2121
        %v2123 = vrot.slane %v2121, 4
        %v2124 = vrot.slane %v1973, 5
        %v2125 = vsel %vm980, %v2123, %v2124
        %v2126 = vrot.slane %v1974, 5
        %v2127 = vrot.slane %v2126, 4
        %v2128 = vrot.slane %v1975, 5
        %v2129 = vsel %vm980, %v2127, %v2128
        %v2130 = vrot.slane %v2128, 4
        %v2131 = vrot.slane %v1976, 5
        %v2132 = vsel %vm980, %v2130, %v2131
        %v2133 = vrot.slane %v1977, 5
        %v2134 = vrot.slane %v2133, 4
        %v2135 = vrot.slane %v1978, 5
        %v2136 = vsel %vm980, %v2134, %v2135
        %v2137 = vrot.slane %v2135, 4
        %v2138 = vrot.slane %v1979, 5
        %v2139 = vsel %vm980, %v2137, %v2138
        %v2140 = vunpack.c.l.b16 %v2031
        %v2141 = vunpack.c.l.b16 %v2034
        %v2142 = vunpack.c.l.b16 %v2038
        %v2143 = vunpack.c.l.b16 %v2041
        %v2144 = vunpack.c.l.b16 %v2045
        %v2145 = vunpack.c.l.b16 %v2048
        %v2146 = vunpack.c.l.b16 %v2052
        %v2147 = vunpack.c.l.b16 %v2055
        %v2148 = vunpack.c.l.b16 %v2059
        %v2149 = vunpack.c.l.b16 %v2062
        %v2150 = vunpack.c.l.b16 %v2066
        %v2151 = vunpack.c.l.b16 %v2069
        %v2152 = vunpack.c.l.b16 %v2073
        %v2153 = vunpack.c.l.b16 %v2076
        %v2154 = vunpack.c.l.b16 %v2080
        %v2155 = vunpack.c.l.b16 %v2083
        %v2156 = vunpack.c.l.b16 %v2087
        %v2157 = vunpack.c.l.b16 %v2090
        %v2158 = vunpack.c.l.b16 %v2094
        %v2159 = vunpack.c.l.b16 %v2097
        %v2160 = vunpack.c.l.b16 %v2101
        %v2161 = vunpack.c.l.b16 %v2104
        %v2162 = vunpack.c.l.b16 %v2108
        %v2163 = vunpack.c.l.b16 %v2111
        %v2164 = vunpack.c.l.b16 %v2115
        %v2165 = vunpack.c.l.b16 %v2118
        %v2166 = vunpack.c.l.b16 %v2122
        %v2167 = vunpack.c.l.b16 %v2125
        %v2168 = vunpack.c.l.b16 %v2129
        %v2169 = vunpack.c.l.b16 %v2132
        %v2170 = vunpack.c.l.b16 %v2136
        %v2171 = vunpack.c.l.b16 %v2139
        %v2172 = vpack.c.b16 %v2141, %v2140
        %v2173 = vpack.c.b16 %v2143, %v2142
        %v2174 = vpack.c.b16 %v2145, %v2144
        %v2175 = vpack.c.b16 %v2147, %v2146
        %v2176 = vpack.c.b16 %v2149, %v2148
        %v2177 = vpack.c.b16 %v2151, %v2150
        %v2178 = vpack.c.b16 %v2153, %v2152
        %v2179 = vpack.c.b16 %v2155, %v2154
        %v2180 = vpack.c.b16 %v2157, %v2156
        %v2181 = vpack.c.b16 %v2159, %v2158
        %v2182 = vpack.c.b16 %v2161, %v2160
        %v2183 = vpack.c.b16 %v2163, %v2162
        %v2184 = vpack.c.b16 %v2165, %v2164
        %v2185 = vpack.c.b16 %v2167, %v2166
        %v2186 = vpack.c.b16 %v2169, %v2168
        %v2187 = vpack.c.b16 %v2171, %v2170
        %2188 = vrot.lane.b32.xlu0 %v2172, 20
        %v2189 = vpop.permute.xlu0 %2188
        %2190 = vrot.lane.b32.xlu0 %v2173, 20
        %v2191 = vpop.permute.xlu0 %2190
        %2192 = vrot.lane.b32.xlu0 %v2174, 20
        %v2193 = vpop.permute.xlu0 %2192
        %2194 = vrot.lane.b32.xlu0 %v2175, 20
        %v2195 = vpop.permute.xlu0 %2194
        %2196 = vrot.lane.b32.xlu0 %v2176, 20
        %v2197 = vpop.permute.xlu0 %2196
        %2198 = vrot.lane.b32.xlu0 %v2177, 20
        %v2199 = vpop.permute.xlu0 %2198
        %2200 = vrot.lane.b32.xlu0 %v2178, 20
        %v2201 = vpop.permute.xlu0 %2200
        %2202 = vrot.lane.b32.xlu0 %v2179, 20
        %v2203 = vpop.permute.xlu0 %2202
        %2204 = vrot.lane.b32.xlu0 %v2180, 20
        %v2205 = vpop.permute.xlu0 %2204
        %2206 = vrot.lane.b32.xlu0 %v2181, 20
        %v2207 = vpop.permute.xlu0 %2206
        %2208 = vrot.lane.b32.xlu0 %v2182, 20
        %v2209 = vpop.permute.xlu0 %2208
        %2210 = vrot.lane.b32.xlu0 %v2183, 20
        %v2211 = vpop.permute.xlu0 %2210
        %2212 = vrot.lane.b32.xlu0 %v2184, 20
        %v2213 = vpop.permute.xlu0 %2212
        %2214 = vrot.lane.b32.xlu0 %v2185, 20
        %v2215 = vpop.permute.xlu0 %2214
        %2216 = vrot.lane.b32.xlu0 %v2186, 20
        %v2217 = vpop.permute.xlu0 %2216
        %2218 = vrot.lane.b32.xlu0 %v2187, 20
        %v2219 = vpop.permute.xlu0 %2218
        %vm2236 = vcmask 195744
        %2237 = vst.msk [vmem:[#allocation2] sm:$0xff] %vm2236, %v2189
        %2238 = vst.msk [vmem:[#allocation2 + $0x8] sm:$0xff] %vm2236, %v2191
        %2239 = vst.msk [vmem:[#allocation2 + $0x10] sm:$0xff] %vm2236, %v2193
        %2240 = vst.msk [vmem:[#allocation2 + $0x18] sm:$0xff] %vm2236, %v2195
        %2241 = vst.msk [vmem:[#allocation2 + $0x20] sm:$0xff] %vm2236, %v2197
        %2242 = vst.msk [vmem:[#allocation2 + $0x28] sm:$0xff] %vm2236, %v2199
        %2243 = vst.msk [vmem:[#allocation2 + $0x30] sm:$0xff] %vm2236, %v2201
        %2244 = vst.msk [vmem:[#allocation2 + $0x38] sm:$0xff] %vm2236, %v2203
        %2245 = vst.msk [vmem:[#allocation2 + $0x40] sm:$0xff] %vm2236, %v2205
        %2246 = vst.msk [vmem:[#allocation2 + $0x48] sm:$0xff] %vm2236, %v2207
        %2247 = vst.msk [vmem:[#allocation2 + $0x50] sm:$0xff] %vm2236, %v2209
        %2248 = vst.msk [vmem:[#allocation2 + $0x58] sm:$0xff] %vm2236, %v2211
        %2249 = vst.msk [vmem:[#allocation2 + $0x60] sm:$0xff] %vm2236, %v2213
        %2250 = vst.msk [vmem:[#allocation2 + $0x68] sm:$0xff] %vm2236, %v2215
        %2251 = vst.msk [vmem:[#allocation2 + $0x70] sm:$0xff] %vm2236, %v2217
        %2252 = vst.msk [vmem:[#allocation2 + $0x78] sm:$0xff] %vm2236, %v2219
        %s2253 = sadd.s32 %s185, 2
        %s2254 = smul.u32 %s2253, 3
        %s2255 = smul.addr %s2254, 4
        %s2256 = scalar_lea.vmem %s182, %s2255
        %v2257 = vld [vmem:[%s2256] sm:$0xf]
        %v2258 = vld [vmem:[%s2256 + $0x4] sm:$0xf]
        %v2259 = vld [vmem:[%s2256 + $0xc] sm:$0xf]
        %v2260 = vld [vmem:[%s2256 + $0x10] sm:$0xf]
        %v2261 = vld [vmem:[%s2256 + $0x18] sm:$0xf]
        %v2262 = vld [vmem:[%s2256 + $0x1c] sm:$0xf]
        %v2263 = vld [vmem:[%s2256 + $0x24] sm:$0xf]
        %v2264 = vld [vmem:[%s2256 + $0x28] sm:$0xf]
        %v2265 = vld [vmem:[%s2256 + $0x30] sm:$0xf]
        %v2266 = vld [vmem:[%s2256 + $0x34] sm:$0xf]
        %v2267 = vld [vmem:[%s2256 + $0x3c] sm:$0xf]
        %v2268 = vld [vmem:[%s2256 + $0x40] sm:$0xf]
        %v2269 = vld [vmem:[%s2256 + $0x48] sm:$0xf]
        %v2270 = vld [vmem:[%s2256 + $0x4c] sm:$0xf]
        %v2271 = vld [vmem:[%s2256 + $0x54] sm:$0xf]
        %v2272 = vld [vmem:[%s2256 + $0x58] sm:$0xf]
        %v2273 = vld [vmem:[%s2256 + $0x60] sm:$0xf]
        %v2274 = vld [vmem:[%s2256 + $0x64] sm:$0xf]
        %v2275 = vld [vmem:[%s2256 + $0x6c] sm:$0xf]
        %v2276 = vld [vmem:[%s2256 + $0x70] sm:$0xf]
        %v2277 = vld [vmem:[%s2256 + $0x78] sm:$0xf]
        %v2278 = vld [vmem:[%s2256 + $0x7c] sm:$0xf]
        %v2279 = vld [vmem:[%s2256 + $0x84] sm:$0xf]
        %v2280 = vld [vmem:[%s2256 + $0x88] sm:$0xf]
        %v2281 = vld [vmem:[%s2256 + $0x90] sm:$0xf]
        %v2282 = vld [vmem:[%s2256 + $0x94] sm:$0xf]
        %v2283 = vld [vmem:[%s2256 + $0x9c] sm:$0xf]
        %v2284 = vld [vmem:[%s2256 + $0xa0] sm:$0xf]
        %v2285 = vld [vmem:[%s2256 + $0xa8] sm:$0xf]
        %v2286 = vld [vmem:[%s2256 + $0xac] sm:$0xf]
        %v2287 = vld [vmem:[%s2256 + $0xb4] sm:$0xf]
        %v2288 = vld [vmem:[%s2256 + $0xb8] sm:$0xf]
        %v2321 = vunpack.c.l.b16 %v2257
        %v2322 = vunpack.c.l.b16 %v2258
        %v2323 = vunpack.c.l.b16 %v2259
        %v2324 = vunpack.c.l.b16 %v2260
        %v2325 = vunpack.c.l.b16 %v2261
        %v2326 = vunpack.c.l.b16 %v2262
        %v2327 = vunpack.c.l.b16 %v2263
        %v2328 = vunpack.c.l.b16 %v2264
        %v2329 = vunpack.c.l.b16 %v2265
        %v2330 = vunpack.c.l.b16 %v2266
        %v2331 = vunpack.c.l.b16 %v2267
        %v2332 = vunpack.c.l.b16 %v2268
        %v2333 = vunpack.c.l.b16 %v2269
        %v2334 = vunpack.c.l.b16 %v2270
        %v2335 = vunpack.c.l.b16 %v2271
        %v2336 = vunpack.c.l.b16 %v2272
        %v2337 = vunpack.c.l.b16 %v2273
        %v2338 = vunpack.c.l.b16 %v2274
        %v2339 = vunpack.c.l.b16 %v2275
        %v2340 = vunpack.c.l.b16 %v2276
        %v2341 = vunpack.c.l.b16 %v2277
        %v2342 = vunpack.c.l.b16 %v2278
        %v2343 = vunpack.c.l.b16 %v2279
        %v2344 = vunpack.c.l.b16 %v2280
        %v2345 = vunpack.c.l.b16 %v2281
        %v2346 = vunpack.c.l.b16 %v2282
        %v2347 = vunpack.c.l.b16 %v2283
        %v2348 = vunpack.c.l.b16 %v2284
        %v2349 = vunpack.c.l.b16 %v2285
        %v2350 = vunpack.c.l.b16 %v2286
        %v2351 = vunpack.c.l.b16 %v2287
        %v2352 = vunpack.c.l.b16 %v2288
        %v2353 = vpack.c.b16 %v2322, %v2321
        %v2354 = vpack.c.b16 %v2324, %v2323
        %v2355 = vpack.c.b16 %v2326, %v2325
        %v2356 = vpack.c.b16 %v2328, %v2327
        %v2357 = vpack.c.b16 %v2330, %v2329
        %v2358 = vpack.c.b16 %v2332, %v2331
        %v2359 = vpack.c.b16 %v2334, %v2333
        %v2360 = vpack.c.b16 %v2336, %v2335
        %v2361 = vpack.c.b16 %v2338, %v2337
        %v2362 = vpack.c.b16 %v2340, %v2339
        %v2363 = vpack.c.b16 %v2342, %v2341
        %v2364 = vpack.c.b16 %v2344, %v2343
        %v2365 = vpack.c.b16 %v2346, %v2345
        %v2366 = vpack.c.b16 %v2348, %v2347
        %v2367 = vpack.c.b16 %v2350, %v2349
        %v2368 = vpack.c.b16 %v2352, %v2351
        %2369 = vrot.lane.b32.xlu0 %v2353, 24
        %v2370 = vpop.permute.xlu0 %2369
        %2371 = vrot.lane.b32.xlu0 %v2354, 24
        %v2372 = vpop.permute.xlu0 %2371
        %2373 = vrot.lane.b32.xlu0 %v2355, 24
        %v2374 = vpop.permute.xlu0 %2373
        %2375 = vrot.lane.b32.xlu0 %v2356, 24
        %v2376 = vpop.permute.xlu0 %2375
        %2377 = vrot.lane.b32.xlu0 %v2357, 24
        %v2378 = vpop.permute.xlu0 %2377
        %2379 = vrot.lane.b32.xlu0 %v2358, 24
        %v2380 = vpop.permute.xlu0 %2379
        %2381 = vrot.lane.b32.xlu0 %v2359, 24
        %v2382 = vpop.permute.xlu0 %2381
        %2383 = vrot.lane.b32.xlu0 %v2360, 24
        %v2384 = vpop.permute.xlu0 %2383
        %2385 = vrot.lane.b32.xlu0 %v2361, 24
        %v2386 = vpop.permute.xlu0 %2385
        %2387 = vrot.lane.b32.xlu0 %v2362, 24
        %v2388 = vpop.permute.xlu0 %2387
        %2389 = vrot.lane.b32.xlu0 %v2363, 24
        %v2390 = vpop.permute.xlu0 %2389
        %2391 = vrot.lane.b32.xlu0 %v2364, 24
        %v2392 = vpop.permute.xlu0 %2391
        %2393 = vrot.lane.b32.xlu0 %v2365, 24
        %v2394 = vpop.permute.xlu0 %2393
        %2395 = vrot.lane.b32.xlu0 %v2366, 24
        %v2396 = vpop.permute.xlu0 %2395
        %2397 = vrot.lane.b32.xlu0 %v2367, 24
        %v2398 = vpop.permute.xlu0 %2397
        %2399 = vrot.lane.b32.xlu0 %v2368, 24
        %v2400 = vpop.permute.xlu0 %2399
        %vm2417 = vcmask 228544
        %2418 = vst.msk [vmem:[#allocation2] sm:$0xff] %vm2417, %v2370
        %2419 = vst.msk [vmem:[#allocation2 + $0x8] sm:$0xff] %vm2417, %v2372
        %2420 = vst.msk [vmem:[#allocation2 + $0x10] sm:$0xff] %vm2417, %v2374
        %2421 = vst.msk [vmem:[#allocation2 + $0x18] sm:$0xff] %vm2417, %v2376
        %2422 = vst.msk [vmem:[#allocation2 + $0x20] sm:$0xff] %vm2417, %v2378
        %2423 = vst.msk [vmem:[#allocation2 + $0x28] sm:$0xff] %vm2417, %v2380
        %2424 = vst.msk [vmem:[#allocation2 + $0x30] sm:$0xff] %vm2417, %v2382
        %2425 = vst.msk [vmem:[#allocation2 + $0x38] sm:$0xff] %vm2417, %v2384
        %2426 = vst.msk [vmem:[#allocation2 + $0x40] sm:$0xff] %vm2417, %v2386
        %2427 = vst.msk [vmem:[#allocation2 + $0x48] sm:$0xff] %vm2417, %v2388
        %2428 = vst.msk [vmem:[#allocation2 + $0x50] sm:$0xff] %vm2417, %v2390
        %2429 = vst.msk [vmem:[#allocation2 + $0x58] sm:$0xff] %vm2417, %v2392
        %2430 = vst.msk [vmem:[#allocation2 + $0x60] sm:$0xff] %vm2417, %v2394
        %2431 = vst.msk [vmem:[#allocation2 + $0x68] sm:$0xff] %vm2417, %v2396
        %2432 = vst.msk [vmem:[#allocation2 + $0x70] sm:$0xff] %vm2417, %v2398
        %2433 = vst.msk [vmem:[#allocation2 + $0x78] sm:$0xff] %vm2417, %v2400
        %v2434 = vld [vmem:[%s2256] sm:$0xf]
        %v2435 = vld [vmem:[%s2256 + $0x4] sm:$0xf]
        %v2436 = vld [vmem:[%s2256 + $0x8] sm:$0x1]
        %v2437 = vld [vmem:[%s2256 + $0xc] sm:$0xf]
        %v2438 = vld [vmem:[%s2256 + $0x10] sm:$0xf]
        %v2439 = vld [vmem:[%s2256 + $0x14] sm:$0x1]
        %v2440 = vld [vmem:[%s2256 + $0x18] sm:$0xf]
        %v2441 = vld [vmem:[%s2256 + $0x1c] sm:$0xf]
        %v2442 = vld [vmem:[%s2256 + $0x20] sm:$0x1]
        %v2443 = vld [vmem:[%s2256 + $0x24] sm:$0xf]
        %v2444 = vld [vmem:[%s2256 + $0x28] sm:$0xf]
        %v2445 = vld [vmem:[%s2256 + $0x2c] sm:$0x1]
        %v2446 = vld [vmem:[%s2256 + $0x30] sm:$0xf]
        %v2447 = vld [vmem:[%s2256 + $0x34] sm:$0xf]
        %v2448 = vld [vmem:[%s2256 + $0x38] sm:$0x1]
        %v2449 = vld [vmem:[%s2256 + $0x3c] sm:$0xf]
        %v2450 = vld [vmem:[%s2256 + $0x40] sm:$0xf]
        %v2451 = vld [vmem:[%s2256 + $0x44] sm:$0x1]
        %v2452 = vld [vmem:[%s2256 + $0x48] sm:$0xf]
        %v2453 = vld [vmem:[%s2256 + $0x4c] sm:$0xf]
        %v2454 = vld [vmem:[%s2256 + $0x50] sm:$0x1]
        %v2455 = vld [vmem:[%s2256 + $0x54] sm:$0xf]
        %v2456 = vld [vmem:[%s2256 + $0x58] sm:$0xf]
        %v2457 = vld [vmem:[%s2256 + $0x5c] sm:$0x1]
        %v2458 = vld [vmem:[%s2256 + $0x60] sm:$0xf]
        %v2459 = vld [vmem:[%s2256 + $0x64] sm:$0xf]
        %v2460 = vld [vmem:[%s2256 + $0x68] sm:$0x1]
        %v2461 = vld [vmem:[%s2256 + $0x6c] sm:$0xf]
        %v2462 = vld [vmem:[%s2256 + $0x70] sm:$0xf]
        %v2463 = vld [vmem:[%s2256 + $0x74] sm:$0x1]
        %v2464 = vld [vmem:[%s2256 + $0x78] sm:$0xf]
        %v2465 = vld [vmem:[%s2256 + $0x7c] sm:$0xf]
        %v2466 = vld [vmem:[%s2256 + $0x80] sm:$0x1]
        %v2467 = vld [vmem:[%s2256 + $0x84] sm:$0xf]
        %v2468 = vld [vmem:[%s2256 + $0x88] sm:$0xf]
        %v2469 = vld [vmem:[%s2256 + $0x8c] sm:$0x1]
        %v2470 = vld [vmem:[%s2256 + $0x90] sm:$0xf]
        %v2471 = vld [vmem:[%s2256 + $0x94] sm:$0xf]
        %v2472 = vld [vmem:[%s2256 + $0x98] sm:$0x1]
        %v2473 = vld [vmem:[%s2256 + $0x9c] sm:$0xf]
        %v2474 = vld [vmem:[%s2256 + $0xa0] sm:$0xf]
        %v2475 = vld [vmem:[%s2256 + $0xa4] sm:$0x1]
        %v2476 = vld [vmem:[%s2256 + $0xa8] sm:$0xf]
        %v2477 = vld [vmem:[%s2256 + $0xac] sm:$0xf]
        %v2478 = vld [vmem:[%s2256 + $0xb0] sm:$0x1]
        %v2479 = vld [vmem:[%s2256 + $0xb4] sm:$0xf]
        %v2480 = vld [vmem:[%s2256 + $0xb8] sm:$0xf]
        %v2481 = vld [vmem:[%s2256 + $0xbc] sm:$0x1]
        %v2483 = vshrl.u32 %v2434, 16
        %v2485 = vrot.slane %v2483, 4
        %v2486 = vshll.u32 %v2434, 16
        %v2488 = vrot.slane %v2486, 5
        %v2489 = vor.u32 %v2485, %v2488
        %v2490 = vrot.slane %v2489, 4
        %v2492 = vshll.u32 %v2435, 16
        %v2494 = vrot.slane %v2492, 5
        %v2495 = vsel %vm384, %v2490, %v2494
        %v2496 = vshrl.u32 %v2435, 16
        %v2498 = vrot.slane %v2496, 4
        %v2499 = vor.u32 %v2498, %v2494
        %v2500 = vrot.slane %v2499, 4
        %v2502 = vshll.u32 %v2436, 16
        %v2504 = vrot.slane %v2502, 5
        %v2505 = vsel %vm384, %v2500, %v2504
        %v2507 = vshrl.u32 %v2437, 16
        %v2509 = vrot.slane %v2507, 4
        %v2510 = vshll.u32 %v2437, 16
        %v2512 = vrot.slane %v2510, 5
        %v2513 = vor.u32 %v2509, %v2512
        %v2514 = vrot.slane %v2513, 4
        %v2516 = vshll.u32 %v2438, 16
        %v2518 = vrot.slane %v2516, 5
        %v2519 = vsel %vm384, %v2514, %v2518
        %v2520 = vshrl.u32 %v2438, 16
        %v2522 = vrot.slane %v2520, 4
        %v2523 = vor.u32 %v2522, %v2518
        %v2524 = vrot.slane %v2523, 4
        %v2526 = vshll.u32 %v2439, 16
        %v2528 = vrot.slane %v2526, 5
        %v2529 = vsel %vm384, %v2524, %v2528
        %v2531 = vshrl.u32 %v2440, 16
        %v2533 = vrot.slane %v2531, 4
        %v2534 = vshll.u32 %v2440, 16
        %v2536 = vrot.slane %v2534, 5
        %v2537 = vor.u32 %v2533, %v2536
        %v2538 = vrot.slane %v2537, 4
        %v2540 = vshll.u32 %v2441, 16
        %v2542 = vrot.slane %v2540, 5
        %v2543 = vsel %vm384, %v2538, %v2542
        %v2544 = vshrl.u32 %v2441, 16
        %v2546 = vrot.slane %v2544, 4
        %v2547 = vor.u32 %v2546, %v2542
        %v2548 = vrot.slane %v2547, 4
        %v2550 = vshll.u32 %v2442, 16
        %v2552 = vrot.slane %v2550, 5
        %v2553 = vsel %vm384, %v2548, %v2552
        %v2555 = vshrl.u32 %v2443, 16
        %v2557 = vrot.slane %v2555, 4
        %v2558 = vshll.u32 %v2443, 16
        %v2560 = vrot.slane %v2558, 5
        %v2561 = vor.u32 %v2557, %v2560
        %v2562 = vrot.slane %v2561, 4
        %v2564 = vshll.u32 %v2444, 16
        %v2566 = vrot.slane %v2564, 5
        %v2567 = vsel %vm384, %v2562, %v2566
        %v2568 = vshrl.u32 %v2444, 16
        %v2570 = vrot.slane %v2568, 4
        %v2571 = vor.u32 %v2570, %v2566
        %v2572 = vrot.slane %v2571, 4
        %v2574 = vshll.u32 %v2445, 16
        %v2576 = vrot.slane %v2574, 5
        %v2577 = vsel %vm384, %v2572, %v2576
        %v2579 = vshrl.u32 %v2446, 16
        %v2581 = vrot.slane %v2579, 4
        %v2582 = vshll.u32 %v2446, 16
        %v2584 = vrot.slane %v2582, 5
        %v2585 = vor.u32 %v2581, %v2584
        %v2586 = vrot.slane %v2585, 4
        %v2588 = vshll.u32 %v2447, 16
        %v2590 = vrot.slane %v2588, 5
        %v2591 = vsel %vm384, %v2586, %v2590
        %v2592 = vshrl.u32 %v2447, 16
        %v2594 = vrot.slane %v2592, 4
        %v2595 = vor.u32 %v2594, %v2590
        %v2596 = vrot.slane %v2595, 4
        %v2598 = vshll.u32 %v2448, 16
        %v2600 = vrot.slane %v2598, 5
        %v2601 = vsel %vm384, %v2596, %v2600
        %v2603 = vshrl.u32 %v2449, 16
        %v2605 = vrot.slane %v2603, 4
        %v2606 = vshll.u32 %v2449, 16
        %v2608 = vrot.slane %v2606, 5
        %v2609 = vor.u32 %v2605, %v2608
        %v2610 = vrot.slane %v2609, 4
        %v2612 = vshll.u32 %v2450, 16
        %v2614 = vrot.slane %v2612, 5
        %v2615 = vsel %vm384, %v2610, %v2614
        %v2616 = vshrl.u32 %v2450, 16
        %v2618 = vrot.slane %v2616, 4
        %v2619 = vor.u32 %v2618, %v2614
        %v2620 = vrot.slane %v2619, 4
        %v2622 = vshll.u32 %v2451, 16
        %v2624 = vrot.slane %v2622, 5
        %v2625 = vsel %vm384, %v2620, %v2624
        %v2627 = vshrl.u32 %v2452, 16
        %v2629 = vrot.slane %v2627, 4
        %v2630 = vshll.u32 %v2452, 16
        %v2632 = vrot.slane %v2630, 5
        %v2633 = vor.u32 %v2629, %v2632
        %v2634 = vrot.slane %v2633, 4
        %v2636 = vshll.u32 %v2453, 16
        %v2638 = vrot.slane %v2636, 5
        %v2639 = vsel %vm384, %v2634, %v2638
        %v2640 = vshrl.u32 %v2453, 16
        %v2642 = vrot.slane %v2640, 4
        %v2643 = vor.u32 %v2642, %v2638
        %v2644 = vrot.slane %v2643, 4
        %v2646 = vshll.u32 %v2454, 16
        %v2648 = vrot.slane %v2646, 5
        %v2649 = vsel %vm384, %v2644, %v2648
        %v2651 = vshrl.u32 %v2455, 16
        %v2653 = vrot.slane %v2651, 4
        %v2654 = vshll.u32 %v2455, 16
        %v2656 = vrot.slane %v2654, 5
        %v2657 = vor.u32 %v2653, %v2656
        %v2658 = vrot.slane %v2657, 4
        %v2660 = vshll.u32 %v2456, 16
        %v2662 = vrot.slane %v2660, 5
        %v2663 = vsel %vm384, %v2658, %v2662
        %v2664 = vshrl.u32 %v2456, 16
        %v2666 = vrot.slane %v2664, 4
        %v2667 = vor.u32 %v2666, %v2662
        %v2668 = vrot.slane %v2667, 4
        %v2670 = vshll.u32 %v2457, 16
        %v2672 = vrot.slane %v2670, 5
        %v2673 = vsel %vm384, %v2668, %v2672
        %v2675 = vshrl.u32 %v2458, 16
        %v2677 = vrot.slane %v2675, 4
        %v2678 = vshll.u32 %v2458, 16
        %v2680 = vrot.slane %v2678, 5
        %v2681 = vor.u32 %v2677, %v2680
        %v2682 = vrot.slane %v2681, 4
        %v2684 = vshll.u32 %v2459, 16
        %v2686 = vrot.slane %v2684, 5
        %v2687 = vsel %vm384, %v2682, %v2686
        %v2688 = vshrl.u32 %v2459, 16
        %v2690 = vrot.slane %v2688, 4
        %v2691 = vor.u32 %v2690, %v2686
        %v2692 = vrot.slane %v2691, 4
        %v2694 = vshll.u32 %v2460, 16
        %v2696 = vrot.slane %v2694, 5
        %v2697 = vsel %vm384, %v2692, %v2696
        %v2699 = vshrl.u32 %v2461, 16
        %v2701 = vrot.slane %v2699, 4
        %v2702 = vshll.u32 %v2461, 16
        %v2704 = vrot.slane %v2702, 5
        %v2705 = vor.u32 %v2701, %v2704
        %v2706 = vrot.slane %v2705, 4
        %v2708 = vshll.u32 %v2462, 16
        %v2710 = vrot.slane %v2708, 5
        %v2711 = vsel %vm384, %v2706, %v2710
        %v2712 = vshrl.u32 %v2462, 16
        %v2714 = vrot.slane %v2712, 4
        %v2715 = vor.u32 %v2714, %v2710
        %v2716 = vrot.slane %v2715, 4
        %v2718 = vshll.u32 %v2463, 16
        %v2720 = vrot.slane %v2718, 5
        %v2721 = vsel %vm384, %v2716, %v2720
        %v2723 = vshrl.u32 %v2464, 16
        %v2725 = vrot.slane %v2723, 4
        %v2726 = vshll.u32 %v2464, 16
        %v2728 = vrot.slane %v2726, 5
        %v2729 = vor.u32 %v2725, %v2728
        %v2730 = vrot.slane %v2729, 4
        %v2732 = vshll.u32 %v2465, 16
        %v2734 = vrot.slane %v2732, 5
        %v2735 = vsel %vm384, %v2730, %v2734
        %v2736 = vshrl.u32 %v2465, 16
        %v2738 = vrot.slane %v2736, 4
        %v2739 = vor.u32 %v2738, %v2734
        %v2740 = vrot.slane %v2739, 4
        %v2742 = vshll.u32 %v2466, 16
        %v2744 = vrot.slane %v2742, 5
        %v2745 = vsel %vm384, %v2740, %v2744
        %v2747 = vshrl.u32 %v2467, 16
        %v2749 = vrot.slane %v2747, 4
        %v2750 = vshll.u32 %v2467, 16
        %v2752 = vrot.slane %v2750, 5
        %v2753 = vor.u32 %v2749, %v2752
        %v2754 = vrot.slane %v2753, 4
        %v2756 = vshll.u32 %v2468, 16
        %v2758 = vrot.slane %v2756, 5
        %v2759 = vsel %vm384, %v2754, %v2758
        %v2760 = vshrl.u32 %v2468, 16
        %v2762 = vrot.slane %v2760, 4
        %v2763 = vor.u32 %v2762, %v2758
        %v2764 = vrot.slane %v2763, 4
        %v2766 = vshll.u32 %v2469, 16
        %v2768 = vrot.slane %v2766, 5
        %v2769 = vsel %vm384, %v2764, %v2768
        %v2771 = vshrl.u32 %v2470, 16
        %v2773 = vrot.slane %v2771, 4
        %v2774 = vshll.u32 %v2470, 16
        %v2776 = vrot.slane %v2774, 5
        %v2777 = vor.u32 %v2773, %v2776
        %v2778 = vrot.slane %v2777, 4
        %v2780 = vshll.u32 %v2471, 16
        %v2782 = vrot.slane %v2780, 5
        %v2783 = vsel %vm384, %v2778, %v2782
        %v2784 = vshrl.u32 %v2471, 16
        %v2786 = vrot.slane %v2784, 4
        %v2787 = vor.u32 %v2786, %v2782
        %v2788 = vrot.slane %v2787, 4
        %v2790 = vshll.u32 %v2472, 16
        %v2792 = vrot.slane %v2790, 5
        %v2793 = vsel %vm384, %v2788, %v2792
        %v2795 = vshrl.u32 %v2473, 16
        %v2797 = vrot.slane %v2795, 4
        %v2798 = vshll.u32 %v2473, 16
        %v2800 = vrot.slane %v2798, 5
        %v2801 = vor.u32 %v2797, %v2800
        %v2802 = vrot.slane %v2801, 4
        %v2804 = vshll.u32 %v2474, 16
        %v2806 = vrot.slane %v2804, 5
        %v2807 = vsel %vm384, %v2802, %v2806
        %v2808 = vshrl.u32 %v2474, 16
        %v2810 = vrot.slane %v2808, 4
        %v2811 = vor.u32 %v2810, %v2806
        %v2812 = vrot.slane %v2811, 4
        %v2814 = vshll.u32 %v2475, 16
        %v2816 = vrot.slane %v2814, 5
        %v2817 = vsel %vm384, %v2812, %v2816
        %v2819 = vshrl.u32 %v2476, 16
        %v2821 = vrot.slane %v2819, 4
        %v2822 = vshll.u32 %v2476, 16
        %v2824 = vrot.slane %v2822, 5
        %v2825 = vor.u32 %v2821, %v2824
        %v2826 = vrot.slane %v2825, 4
        %v2828 = vshll.u32 %v2477, 16
        %v2830 = vrot.slane %v2828, 5
        %v2831 = vsel %vm384, %v2826, %v2830
        %v2832 = vshrl.u32 %v2477, 16
        %v2834 = vrot.slane %v2832, 4
        %v2835 = vor.u32 %v2834, %v2830
        %v2836 = vrot.slane %v2835, 4
        %v2838 = vshll.u32 %v2478, 16
        %v2840 = vrot.slane %v2838, 5
        %v2841 = vsel %vm384, %v2836, %v2840
        %v2843 = vshrl.u32 %v2479, 16
        %v2845 = vrot.slane %v2843, 4
        %v2846 = vshll.u32 %v2479, 16
        %v2848 = vrot.slane %v2846, 5
        %v2849 = vor.u32 %v2845, %v2848
        %v2850 = vrot.slane %v2849, 4
        %v2852 = vshll.u32 %v2480, 16
        %v2854 = vrot.slane %v2852, 5
        %v2855 = vsel %vm384, %v2850, %v2854
        %v2856 = vshrl.u32 %v2480, 16
        %v2858 = vrot.slane %v2856, 4
        %v2859 = vor.u32 %v2858, %v2854
        %v2860 = vrot.slane %v2859, 4
        %v2862 = vshll.u32 %v2481, 16
        %v2864 = vrot.slane %v2862, 5
        %v2865 = vsel %vm384, %v2860, %v2864
        %v2866 = vunpack.c.l.b16 %v2495
        %v2867 = vunpack.c.l.b16 %v2505
        %v2868 = vunpack.c.l.b16 %v2519
        %v2869 = vunpack.c.l.b16 %v2529
        %v2870 = vunpack.c.l.b16 %v2543
        %v2871 = vunpack.c.l.b16 %v2553
        %v2872 = vunpack.c.l.b16 %v2567
        %v2873 = vunpack.c.l.b16 %v2577
        %v2874 = vunpack.c.l.b16 %v2591
        %v2875 = vunpack.c.l.b16 %v2601
        %v2876 = vunpack.c.l.b16 %v2615
        %v2877 = vunpack.c.l.b16 %v2625
        %v2878 = vunpack.c.l.b16 %v2639
        %v2879 = vunpack.c.l.b16 %v2649
        %v2880 = vunpack.c.l.b16 %v2663
        %v2881 = vunpack.c.l.b16 %v2673
        %v2882 = vunpack.c.l.b16 %v2687
        %v2883 = vunpack.c.l.b16 %v2697
        %v2884 = vunpack.c.l.b16 %v2711
        %v2885 = vunpack.c.l.b16 %v2721
        %v2886 = vunpack.c.l.b16 %v2735
        %v2887 = vunpack.c.l.b16 %v2745
        %v2888 = vunpack.c.l.b16 %v2759
        %v2889 = vunpack.c.l.b16 %v2769
        %v2890 = vunpack.c.l.b16 %v2783
        %v2891 = vunpack.c.l.b16 %v2793
        %v2892 = vunpack.c.l.b16 %v2807
        %v2893 = vunpack.c.l.b16 %v2817
        %v2894 = vunpack.c.l.b16 %v2831
        %v2895 = vunpack.c.l.b16 %v2841
        %v2896 = vunpack.c.l.b16 %v2855
        %v2897 = vunpack.c.l.b16 %v2865
        %v2898 = vpack.c.b16 %v2867, %v2866
        %v2899 = vpack.c.b16 %v2869, %v2868
        %v2900 = vpack.c.b16 %v2871, %v2870
        %v2901 = vpack.c.b16 %v2873, %v2872
        %v2902 = vpack.c.b16 %v2875, %v2874
        %v2903 = vpack.c.b16 %v2877, %v2876
        %v2904 = vpack.c.b16 %v2879, %v2878
        %v2905 = vpack.c.b16 %v2881, %v2880
        %v2906 = vpack.c.b16 %v2883, %v2882
        %v2907 = vpack.c.b16 %v2885, %v2884
        %v2908 = vpack.c.b16 %v2887, %v2886
        %v2909 = vpack.c.b16 %v2889, %v2888
        %v2910 = vpack.c.b16 %v2891, %v2890
        %v2911 = vpack.c.b16 %v2893, %v2892
        %v2912 = vpack.c.b16 %v2895, %v2894
        %v2913 = vpack.c.b16 %v2897, %v2896
        %2914 = vrot.lane.b32.xlu0 %v2898, 28
        %v2915 = vpop.permute.xlu0 %2914
        %2916 = vrot.lane.b32.xlu0 %v2899, 28
        %v2917 = vpop.permute.xlu0 %2916
        %2918 = vrot.lane.b32.xlu0 %v2900, 28
        %v2919 = vpop.permute.xlu0 %2918
        %2920 = vrot.lane.b32.xlu0 %v2901, 28
        %v2921 = vpop.permute.xlu0 %2920
        %2922 = vrot.lane.b32.xlu0 %v2902, 28
        %v2923 = vpop.permute.xlu0 %2922
        %2924 = vrot.lane.b32.xlu0 %v2903, 28
        %v2925 = vpop.permute.xlu0 %2924
        %2926 = vrot.lane.b32.xlu0 %v2904, 28
        %v2927 = vpop.permute.xlu0 %2926
        %2928 = vrot.lane.b32.xlu0 %v2905, 28
        %v2929 = vpop.permute.xlu0 %2928
        %2930 = vrot.lane.b32.xlu0 %v2906, 28
        %v2931 = vpop.permute.xlu0 %2930
        %2932 = vrot.lane.b32.xlu0 %v2907, 28
        %v2933 = vpop.permute.xlu0 %2932
        %2934 = vrot.lane.b32.xlu0 %v2908, 28
        %v2935 = vpop.permute.xlu0 %2934
        %2936 = vrot.lane.b32.xlu0 %v2909, 28
        %v2937 = vpop.permute.xlu0 %2936
        %2938 = vrot.lane.b32.xlu0 %v2910, 28
        %v2939 = vpop.permute.xlu0 %2938
        %2940 = vrot.lane.b32.xlu0 %v2911, 28
        %v2941 = vpop.permute.xlu0 %2940
        %2942 = vrot.lane.b32.xlu0 %v2912, 28
        %v2943 = vpop.permute.xlu0 %2942
        %2944 = vrot.lane.b32.xlu0 %v2913, 28
        %v2945 = vpop.permute.xlu0 %2944
        %vm2962 = vcmask 261344
        %2963 = vst.msk [vmem:[#allocation2] sm:$0xff] %vm2962, %v2915
        %2964 = vst.msk [vmem:[#allocation2 + $0x8] sm:$0xff] %vm2962, %v2917
        %2965 = vst.msk [vmem:[#allocation2 + $0x10] sm:$0xff] %vm2962, %v2919
        %2966 = vst.msk [vmem:[#allocation2 + $0x18] sm:$0xff] %vm2962, %v2921
        %2967 = vst.msk [vmem:[#allocation2 + $0x20] sm:$0xff] %vm2962, %v2923
        %2968 = vst.msk [vmem:[#allocation2 + $0x28] sm:$0xff] %vm2962, %v2925
        %2969 = vst.msk [vmem:[#allocation2 + $0x30] sm:$0xff] %vm2962, %v2927
        %2970 = vst.msk [vmem:[#allocation2 + $0x38] sm:$0xff] %vm2962, %v2929
        %2971 = vst.msk [vmem:[#allocation2 + $0x40] sm:$0xff] %vm2962, %v2931
        %2972 = vst.msk [vmem:[#allocation2 + $0x48] sm:$0xff] %vm2962, %v2933
        %2973 = vst.msk [vmem:[#allocation2 + $0x50] sm:$0xff] %vm2962, %v2935
        %2974 = vst.msk [vmem:[#allocation2 + $0x58] sm:$0xff] %vm2962, %v2937
        %2975 = vst.msk [vmem:[#allocation2 + $0x60] sm:$0xff] %vm2962, %v2939
        %2976 = vst.msk [vmem:[#allocation2 + $0x68] sm:$0xff] %vm2962, %v2941
        %2977 = vst.msk [vmem:[#allocation2 + $0x70] sm:$0xff] %vm2962, %v2943
        %2978 = vst.msk [vmem:[#allocation2 + $0x78] sm:$0xff] %vm2962, %v2945
        %v2979 = vld [vmem:[%s2256] sm:$0xe]
        %v2980 = vld [vmem:[%s2256 + $0x4] sm:$0xf]
        %v2981 = vld [vmem:[%s2256 + $0x8] sm:$0x1]
        %v2982 = vld [vmem:[%s2256 + $0xc] sm:$0xe]
        %v2983 = vld [vmem:[%s2256 + $0x10] sm:$0xf]
        %v2984 = vld [vmem:[%s2256 + $0x14] sm:$0x1]
        %v2985 = vld [vmem:[%s2256 + $0x18] sm:$0xe]
        %v2986 = vld [vmem:[%s2256 + $0x1c] sm:$0xf]
        %v2987 = vld [vmem:[%s2256 + $0x20] sm:$0x1]
        %v2988 = vld [vmem:[%s2256 + $0x24] sm:$0xe]
        %v2989 = vld [vmem:[%s2256 + $0x28] sm:$0xf]
        %v2990 = vld [vmem:[%s2256 + $0x2c] sm:$0x1]
        %v2991 = vld [vmem:[%s2256 + $0x30] sm:$0xe]
        %v2992 = vld [vmem:[%s2256 + $0x34] sm:$0xf]
        %v2993 = vld [vmem:[%s2256 + $0x38] sm:$0x1]
        %v2994 = vld [vmem:[%s2256 + $0x3c] sm:$0xe]
        %v2995 = vld [vmem:[%s2256 + $0x40] sm:$0xf]
        %v2996 = vld [vmem:[%s2256 + $0x44] sm:$0x1]
        %v2997 = vld [vmem:[%s2256 + $0x48] sm:$0xe]
        %v2998 = vld [vmem:[%s2256 + $0x4c] sm:$0xf]
        %v2999 = vld [vmem:[%s2256 + $0x50] sm:$0x1]
        %v3000 = vld [vmem:[%s2256 + $0x54] sm:$0xe]
        %v3001 = vld [vmem:[%s2256 + $0x58] sm:$0xf]
        %v3002 = vld [vmem:[%s2256 + $0x5c] sm:$0x1]
        %v3003 = vld [vmem:[%s2256 + $0x60] sm:$0xe]
        %v3004 = vld [vmem:[%s2256 + $0x64] sm:$0xf]
        %v3005 = vld [vmem:[%s2256 + $0x68] sm:$0x1]
        %v3006 = vld [vmem:[%s2256 + $0x6c] sm:$0xe]
        %v3007 = vld [vmem:[%s2256 + $0x70] sm:$0xf]
        %v3008 = vld [vmem:[%s2256 + $0x74] sm:$0x1]
        %v3009 = vld [vmem:[%s2256 + $0x78] sm:$0xe]
        %v3010 = vld [vmem:[%s2256 + $0x7c] sm:$0xf]
        %v3011 = vld [vmem:[%s2256 + $0x80] sm:$0x1]
        %v3012 = vld [vmem:[%s2256 + $0x84] sm:$0xe]
        %v3013 = vld [vmem:[%s2256 + $0x88] sm:$0xf]
        %v3014 = vld [vmem:[%s2256 + $0x8c] sm:$0x1]
        %v3015 = vld [vmem:[%s2256 + $0x90] sm:$0xe]
        %v3016 = vld [vmem:[%s2256 + $0x94] sm:$0xf]
        %v3017 = vld [vmem:[%s2256 + $0x98] sm:$0x1]
        %v3018 = vld [vmem:[%s2256 + $0x9c] sm:$0xe]
        %v3019 = vld [vmem:[%s2256 + $0xa0] sm:$0xf]
        %v3020 = vld [vmem:[%s2256 + $0xa4] sm:$0x1]
        %v3021 = vld [vmem:[%s2256 + $0xa8] sm:$0xe]
        %v3022 = vld [vmem:[%s2256 + $0xac] sm:$0xf]
        %v3023 = vld [vmem:[%s2256 + $0xb0] sm:$0x1]
        %v3024 = vld [vmem:[%s2256 + $0xb4] sm:$0xe]
        %v3025 = vld [vmem:[%s2256 + $0xb8] sm:$0xf]
        %v3026 = vld [vmem:[%s2256 + $0xbc] sm:$0x1]
        %v3075 = vrot.slane %v2979, 5
        %v3076 = vrot.slane %v3075, 4
        %v3077 = vrot.slane %v2980, 5
        %v3078 = vsel %vm980, %v3076, %v3077
        %v3079 = vrot.slane %v3077, 4
        %v3080 = vrot.slane %v2981, 5
        %v3081 = vsel %vm980, %v3079, %v3080
        %v3082 = vrot.slane %v2982, 5
        %v3083 = vrot.slane %v3082, 4
        %v3084 = vrot.slane %v2983, 5
        %v3085 = vsel %vm980, %v3083, %v3084
        %v3086 = vrot.slane %v3084, 4
        %v3087 = vrot.slane %v2984, 5
        %v3088 = vsel %vm980, %v3086, %v3087
        %v3089 = vrot.slane %v2985, 5
        %v3090 = vrot.slane %v3089, 4
        %v3091 = vrot.slane %v2986, 5
        %v3092 = vsel %vm980, %v3090, %v3091
        %v3093 = vrot.slane %v3091, 4
        %v3094 = vrot.slane %v2987, 5
        %v3095 = vsel %vm980, %v3093, %v3094
        %v3096 = vrot.slane %v2988, 5
        %v3097 = vrot.slane %v3096, 4
        %v3098 = vrot.slane %v2989, 5
        %v3099 = vsel %vm980, %v3097, %v3098
        %v3100 = vrot.slane %v3098, 4
        %v3101 = vrot.slane %v2990, 5
        %v3102 = vsel %vm980, %v3100, %v3101
        %v3103 = vrot.slane %v2991, 5
        %v3104 = vrot.slane %v3103, 4
        %v3105 = vrot.slane %v2992, 5
        %v3106 = vsel %vm980, %v3104, %v3105
        %v3107 = vrot.slane %v3105, 4
        %v3108 = vrot.slane %v2993, 5
        %v3109 = vsel %vm980, %v3107, %v3108
        %v3110 = vrot.slane %v2994, 5
        %v3111 = vrot.slane %v3110, 4
        %v3112 = vrot.slane %v2995, 5
        %v3113 = vsel %vm980, %v3111, %v3112
        %v3114 = vrot.slane %v3112, 4
        %v3115 = vrot.slane %v2996, 5
        %v3116 = vsel %vm980, %v3114, %v3115
        %v3117 = vrot.slane %v2997, 5
        %v3118 = vrot.slane %v3117, 4
        %v3119 = vrot.slane %v2998, 5
        %v3120 = vsel %vm980, %v3118, %v3119
        %v3121 = vrot.slane %v3119, 4
        %v3122 = vrot.slane %v2999, 5
        %v3123 = vsel %vm980, %v3121, %v3122
        %v3124 = vrot.slane %v3000, 5
        %v3125 = vrot.slane %v3124, 4
        %v3126 = vrot.slane %v3001, 5
        %v3127 = vsel %vm980, %v3125, %v3126
        %v3128 = vrot.slane %v3126, 4
        %v3129 = vrot.slane %v3002, 5
        %v3130 = vsel %vm980, %v3128, %v3129
        %v3131 = vrot.slane %v3003, 5
        %v3132 = vrot.slane %v3131, 4
        %v3133 = vrot.slane %v3004, 5
        %v3134 = vsel %vm980, %v3132, %v3133
        %v3135 = vrot.slane %v3133, 4
        %v3136 = vrot.slane %v3005, 5
        %v3137 = vsel %vm980, %v3135, %v3136
        %v3138 = vrot.slane %v3006, 5
        %v3139 = vrot.slane %v3138, 4
        %v3140 = vrot.slane %v3007, 5
        %v3141 = vsel %vm980, %v3139, %v3140
        %v3142 = vrot.slane %v3140, 4
        %v3143 = vrot.slane %v3008, 5
        %v3144 = vsel %vm980, %v3142, %v3143
        %v3145 = vrot.slane %v3009, 5
        %v3146 = vrot.slane %v3145, 4
        %v3147 = vrot.slane %v3010, 5
        %v3148 = vsel %vm980, %v3146, %v3147
        %v3149 = vrot.slane %v3147, 4
        %v3150 = vrot.slane %v3011, 5
        %v3151 = vsel %vm980, %v3149, %v3150
        %v3152 = vrot.slane %v3012, 5
        %v3153 = vrot.slane %v3152, 4
        %v3154 = vrot.slane %v3013, 5
        %v3155 = vsel %vm980, %v3153, %v3154
        %v3156 = vrot.slane %v3154, 4
        %v3157 = vrot.slane %v3014, 5
        %v3158 = vsel %vm980, %v3156, %v3157
        %v3159 = vrot.slane %v3015, 5
        %v3160 = vrot.slane %v3159, 4
        %v3161 = vrot.slane %v3016, 5
        %v3162 = vsel %vm980, %v3160, %v3161
        %v3163 = vrot.slane %v3161, 4
        %v3164 = vrot.slane %v3017, 5
        %v3165 = vsel %vm980, %v3163, %v3164
        %v3166 = vrot.slane %v3018, 5
        %v3167 = vrot.slane %v3166, 4
        %v3168 = vrot.slane %v3019, 5
        %v3169 = vsel %vm980, %v3167, %v3168
        %v3170 = vrot.slane %v3168, 4
        %v3171 = vrot.slane %v3020, 5
        %v3172 = vsel %vm980, %v3170, %v3171
        %v3173 = vrot.slane %v3021, 5
        %v3174 = vrot.slane %v3173, 4
        %v3175 = vrot.slane %v3022, 5
        %v3176 = vsel %vm980, %v3174, %v3175
        %v3177 = vrot.slane %v3175, 4
        %v3178 = vrot.slane %v3023, 5
        %v3179 = vsel %vm980, %v3177, %v3178
        %v3180 = vrot.slane %v3024, 5
        %v3181 = vrot.slane %v3180, 4
        %v3182 = vrot.slane %v3025, 5
        %v3183 = vsel %vm980, %v3181, %v3182
        %v3184 = vrot.slane %v3182, 4
        %v3185 = vrot.slane %v3026, 5
        %v3186 = vsel %vm980, %v3184, %v3185
        %v3187 = vunpack.c.l.b16 %v3078
        %v3188 = vunpack.c.l.b16 %v3081
        %v3189 = vunpack.c.l.b16 %v3085
        %v3190 = vunpack.c.l.b16 %v3088
        %v3191 = vunpack.c.l.b16 %v3092
        %v3192 = vunpack.c.l.b16 %v3095
        %v3193 = vunpack.c.l.b16 %v3099
        %v3194 = vunpack.c.l.b16 %v3102
        %v3195 = vunpack.c.l.b16 %v3106
        %v3196 = vunpack.c.l.b16 %v3109
        %v3197 = vunpack.c.l.b16 %v3113
        %v3198 = vunpack.c.l.b16 %v3116
        %v3199 = vunpack.c.l.b16 %v3120
        %v3200 = vunpack.c.l.b16 %v3123
        %v3201 = vunpack.c.l.b16 %v3127
        %v3202 = vunpack.c.l.b16 %v3130
        %v3203 = vunpack.c.l.b16 %v3134
        %v3204 = vunpack.c.l.b16 %v3137
        %v3205 = vunpack.c.l.b16 %v3141
        %v3206 = vunpack.c.l.b16 %v3144
        %v3207 = vunpack.c.l.b16 %v3148
        %v3208 = vunpack.c.l.b16 %v3151
        %v3209 = vunpack.c.l.b16 %v3155
        %v3210 = vunpack.c.l.b16 %v3158
        %v3211 = vunpack.c.l.b16 %v3162
        %v3212 = vunpack.c.l.b16 %v3165
        %v3213 = vunpack.c.l.b16 %v3169
        %v3214 = vunpack.c.l.b16 %v3172
        %v3215 = vunpack.c.l.b16 %v3176
        %v3216 = vunpack.c.l.b16 %v3179
        %v3217 = vunpack.c.l.b16 %v3183
        %v3218 = vunpack.c.l.b16 %v3186
        %v3219 = vpack.c.b16 %v3188, %v3187
        %v3220 = vpack.c.b16 %v3190, %v3189
        %v3221 = vpack.c.b16 %v3192, %v3191
        %v3222 = vpack.c.b16 %v3194, %v3193
        %v3223 = vpack.c.b16 %v3196, %v3195
        %v3224 = vpack.c.b16 %v3198, %v3197
        %v3225 = vpack.c.b16 %v3200, %v3199
        %v3226 = vpack.c.b16 %v3202, %v3201
        %v3227 = vpack.c.b16 %v3204, %v3203
        %v3228 = vpack.c.b16 %v3206, %v3205
        %v3229 = vpack.c.b16 %v3208, %v3207
        %v3230 = vpack.c.b16 %v3210, %v3209
        %v3231 = vpack.c.b16 %v3212, %v3211
        %v3232 = vpack.c.b16 %v3214, %v3213
        %v3233 = vpack.c.b16 %v3216, %v3215
        %v3234 = vpack.c.b16 %v3218, %v3217
        %3235 = vrot.lane.b32.xlu0 %v3219, 32
        %v3236 = vpop.permute.xlu0 %3235
        %3237 = vrot.lane.b32.xlu0 %v3220, 32
        %v3238 = vpop.permute.xlu0 %3237
        %3239 = vrot.lane.b32.xlu0 %v3221, 32
        %v3240 = vpop.permute.xlu0 %3239
        %3241 = vrot.lane.b32.xlu0 %v3222, 32
        %v3242 = vpop.permute.xlu0 %3241
        %3243 = vrot.lane.b32.xlu0 %v3223, 32
        %v3244 = vpop.permute.xlu0 %3243
        %3245 = vrot.lane.b32.xlu0 %v3224, 32
        %v3246 = vpop.permute.xlu0 %3245
        %3247 = vrot.lane.b32.xlu0 %v3225, 32
        %v3248 = vpop.permute.xlu0 %3247
        %3249 = vrot.lane.b32.xlu0 %v3226, 32
        %v3250 = vpop.permute.xlu0 %3249
        %3251 = vrot.lane.b32.xlu0 %v3227, 32
        %v3252 = vpop.permute.xlu0 %3251
        %3253 = vrot.lane.b32.xlu0 %v3228, 32
        %v3254 = vpop.permute.xlu0 %3253
        %3255 = vrot.lane.b32.xlu0 %v3229, 32
        %v3256 = vpop.permute.xlu0 %3255
        %3257 = vrot.lane.b32.xlu0 %v3230, 32
        %v3258 = vpop.permute.xlu0 %3257
        %3259 = vrot.lane.b32.xlu0 %v3231, 32
        %v3260 = vpop.permute.xlu0 %3259
        %3261 = vrot.lane.b32.xlu0 %v3232, 32
        %v3262 = vpop.permute.xlu0 %3261
        %3263 = vrot.lane.b32.xlu0 %v3233, 32
        %v3264 = vpop.permute.xlu0 %3263
        %3265 = vrot.lane.b32.xlu0 %v3234, 32
        %v3266 = vpop.permute.xlu0 %3265
        %vm3283 = vcmask 294144
        %3284 = vst.msk [vmem:[#allocation2] sm:$0xff] %vm3283, %v3236
        %3285 = vst.msk [vmem:[#allocation2 + $0x8] sm:$0xff] %vm3283, %v3238
        %3286 = vst.msk [vmem:[#allocation2 + $0x10] sm:$0xff] %vm3283, %v3240
        %3287 = vst.msk [vmem:[#allocation2 + $0x18] sm:$0xff] %vm3283, %v3242
        %3288 = vst.msk [vmem:[#allocation2 + $0x20] sm:$0xff] %vm3283, %v3244
        %3289 = vst.msk [vmem:[#allocation2 + $0x28] sm:$0xff] %vm3283, %v3246
        %3290 = vst.msk [vmem:[#allocation2 + $0x30] sm:$0xff] %vm3283, %v3248
        %3291 = vst.msk [vmem:[#allocation2 + $0x38] sm:$0xff] %vm3283, %v3250
        %3292 = vst.msk [vmem:[#allocation2 + $0x40] sm:$0xff] %vm3283, %v3252
        %3293 = vst.msk [vmem:[#allocation2 + $0x48] sm:$0xff] %vm3283, %v3254
        %3294 = vst.msk [vmem:[#allocation2 + $0x50] sm:$0xff] %vm3283, %v3256
        %3295 = vst.msk [vmem:[#allocation2 + $0x58] sm:$0xff] %vm3283, %v3258
        %3296 = vst.msk [vmem:[#allocation2 + $0x60] sm:$0xff] %vm3283, %v3260
        %3297 = vst.msk [vmem:[#allocation2 + $0x68] sm:$0xff] %vm3283, %v3262
        %3298 = vst.msk [vmem:[#allocation2 + $0x70] sm:$0xff] %vm3283, %v3264
        %3299 = vst.msk [vmem:[#allocation2 + $0x78] sm:$0xff] %vm3283, %v3266
        %v3300 = vld [vmem:[%s1] sm:$0xf]
        %v3301 = vld [vmem:[#allocation2] sm:$0xff]
        %v3302 = vld [vmem:[#allocation2 + $0x8] sm:$0xff]
        %v3303 = vld [vmem:[#allocation2 + $0x10] sm:$0xff]
        %v3304 = vld [vmem:[#allocation2 + $0x18] sm:$0xff]
        %v3305 = vld [vmem:[#allocation2 + $0x20] sm:$0xff]
        %v3306 = vld [vmem:[#allocation2 + $0x28] sm:$0xff]
        %v3307 = vld [vmem:[#allocation2 + $0x30] sm:$0xff]
        %v3308 = vld [vmem:[#allocation2 + $0x38] sm:$0xff]
        %v3309 = vld [vmem:[#allocation2 + $0x40] sm:$0xff]
        %v3310 = vld [vmem:[#allocation2 + $0x48] sm:$0xff]
        %v3311 = vld [vmem:[#allocation2 + $0x50] sm:$0xff]
        %v3312 = vld [vmem:[#allocation2 + $0x58] sm:$0xff]
        %v3313 = vld [vmem:[#allocation2 + $0x60] sm:$0xff]
        %v3314 = vld [vmem:[#allocation2 + $0x68] sm:$0xff]
        %v3315 = vld [vmem:[#allocation2 + $0x70] sm:$0xff]
        %v3316 = vld [vmem:[#allocation2 + $0x78] sm:$0xff]
        %v3317 = vld [vmem:[%s2] sm:$0xff]
        %3319 = vset.pattern.permute.xlu0 0
        %3320 = vperm.xlu0 %3319, %v3317
        %v3321 = vpop.permute.xlu0 %3320
        %vm3323 = vcmask 293888
        %v3325 = vsel %vm3323, %v3300, 0
        %v3328 = vsel %vm3323, %v3301, 0
        %v3331 = vsel %vm3323, %v3302, 0
        %v3334 = vsel %vm3323, %v3303, 0
        %v3337 = vsel %vm3323, %v3304, 0
        %v3340 = vsel %vm3323, %v3305, 0
        %v3343 = vsel %vm3323, %v3306, 0
        %v3346 = vsel %vm3323, %v3307, 0
        %v3349 = vsel %vm3323, %v3308, 0
        %v3352 = vsel %vm3323, %v3309, 0
        %v3355 = vsel %vm3323, %v3310, 0
        %v3358 = vsel %vm3323, %v3311, 0
        %v3361 = vsel %vm3323, %v3312, 0
        %v3364 = vsel %vm3323, %v3313, 0
        %v3367 = vsel %vm3323, %v3314, 0
        %v3370 = vsel %vm3323, %v3315, 0
        %v3373 = vsel %vm3323, %v3316, 0
        %3375 = vmatprep.subr.bf16.mxu0 0
        %3376 = vmatpush1.bf16.xpose.msra.mxu0 %v3328
        %3377 = vmatprep.subr.bf16.mxu0 0
        %3378 = vmatpush1.bf16.xpose.msra.mxu0 %v3331
        %3379 = vmatprep.subr.bf16.mxu0 0
        %3380 = vmatpush1.bf16.xpose.msra.mxu0 %v3334
        %3381 = vmatprep.subr.bf16.mxu0 0
        %3382 = vmatpush1.bf16.xpose.msra.mxu0 %v3337
        %3383 = vmatprep.subr.bf16.mxu0 0
        %3384 = vmatpush1.bf16.xpose.msra.mxu0 %v3340
        %3385 = vmatprep.subr.bf16.mxu0 0
        %3386 = vmatpush1.bf16.xpose.msra.mxu0 %v3343
        %3387 = vmatprep.subr.bf16.mxu0 0
        %3388 = vmatpush1.bf16.xpose.msra.mxu0 %v3346
        %3389 = vmatprep.subr.bf16.mxu0 0
        %3390 = vmatpush1.bf16.xpose.msra.mxu0 %v3349
        %3391 = vmatprep.subr.bf16.mxu0 0
        %3392 = vmatpush1.bf16.xpose.msra.mxu0 %v3352
        %3393 = vmatprep.subr.bf16.mxu0 0
        %3394 = vmatpush1.bf16.xpose.msra.mxu0 %v3355
        %3395 = vmatprep.subr.bf16.mxu0 0
        %3396 = vmatpush1.bf16.xpose.msra.mxu0 %v3358
        %3397 = vmatprep.subr.bf16.mxu0 0
        %3398 = vmatpush1.bf16.xpose.msra.mxu0 %v3361
        %3399 = vmatprep.subr.bf16.mxu0 0
        %3400 = vmatpush1.bf16.xpose.msra.mxu0 %v3364
        %3401 = vmatprep.subr.bf16.mxu0 0
        %3402 = vmatpush1.bf16.xpose.msra.mxu0 %v3367
        %3403 = vmatprep.subr.bf16.mxu0 0
        %3404 = vmatpush1.bf16.xpose.msra.mxu0 %v3370
        %3405 = vmatprep.subr.bf16.mxu0 0
        %3406 = vmatpush1.bf16.xpose.msra.mxu0 %v3373
        %3407 = vmatprep.mubr.bf16.mxu0 0
        %3408 = vmatmul.mubr.bf16.gmra.mrb[0].mxu0 %v3325
        %v3409 = vpop.f32.mrb[0].mxu0
        %v3410 = vadd.f32 %v3321, %v3409
        %v3411 = vpop.f32.mrb[0].mxu0
        %v3412 = vadd.f32 %v3321, %v3411
        %v3413 = vpop.f32.mrb[0].mxu0
        %v3414 = vpop.f32.mrb[0].mxu0
        %3415 = vdwg.mxu0
        %v3416 = vmax.f32 %v3410, 0.0
        %v3417 = vmax.f32 %v3412, 0.0
        %3418 = vst [vmem:[%s177] sm:$0xff] %v3416
        %3419 = vst [vmem:[%s177 + $0x8] sm:$0xff] %v3417
        %s3420 = sand.u32 %s107, 1
        %s3421 = scalar_lea.sflag [#allocation4], %s3420
        %s3422 = sand.u32 %s107, 1
        %s3423 = smul.addr %s3422, 16
        %s3424 = scalar_lea.vmem [#allocation3], %s3423
        // Predicated region
        $region33: #{tpu_custom_call.1} parent=31 // pred_check
          %p3425 = pneg %p117
        $region34: #{tpu_custom_call.1} parent=31 // pred_check_branch
          %3427 = sbr.rel (%p3425) target = $region36
        $region35: #{tpu_custom_call.1} parent=31 // pred_region
          %s3428 = smul.u32 2, %s22
          %s3430 = ssub.s32 256, 256
          %3431 = vsyncadd %s3421, %s3430
          %s3432 = smul.addr %s21, 2
          %s3433 = sadd.s32 %s3428, %s3432
          %s3434 = smul.addr %s3433, 128
          %s3435 = scalar_lea.hbm %s3, %s3434
          %s3437 = sshll.u32 %s3424, 4
          %s3438 = int_to_ptr.vmem [resolvable:$true] %s3437
          %3440 = dma.vmem_to_hbm [thread:$0]  %s3438, 256, %s3435, %s3421
        $region36: #{tpu_custom_call.1} parent=31 // pred_fallthru
          _
      $region32: #{tpu_custom_call.1} parent=5 // pred_fallthru
        _
      %p3441 = scmp.le.s32.totalorder 2, %s12
      // Predicated region
      $region37: #{tpu_custom_call.1} parent=5 // pred_check
        %p3442 = pneg %p3441
      $region38: #{tpu_custom_call.1} parent=5 // pred_check_branch
        %3444 = sbr.rel (%p3442) target = $region40
      $region39: #{tpu_custom_call.1} parent=5 // pred_region
        %s3445 = ssub.s32 %s12, 2
        // Predicated region
        $region41: #{tpu_custom_call.1} parent=39 // pred_check
          %p3446 = pneg %p123
        $region42: #{tpu_custom_call.1} parent=39 // pred_check_branch
          %3448 = sbr.rel (%p3446) target = $region44
        $region43: #{tpu_custom_call.1} parent=39 // pred_region
          %s3449 = sand.u32 %s108, 1
          %s3450 = scalar_lea.sflag [#allocation4], %s3449
          %s3451 = sand.u32 %s108, 1
          %s3452 = smul.addr %s3451, 16
          %s3453 = scalar_lea.vmem [#allocation3], %s3452
          %3454 = dma.done %s3450, 256
        $region44: #{tpu_custom_call.1} parent=39 // pred_fallthru
          _
      $region40: #{tpu_custom_call.1} parent=5 // pred_fallthru
        _
    $region6: #{tpu_custom_call.1} parent=1 // loop_footer
      %s16 = sadd.s32 1, %s12
    $region7: #{tpu_custom_call.1} parent=1 // loop_footer_branch
      %11 = sbr.rel target = $region3
    $region8: #{tpu_custom_call.1} parent=1 // loop_exit
      _
    %3455 = vsyncpa [#allocation4], 1
    %s3456 = scalar_lea.sflag [#allocation4], 1
    %3457 = vsyncpa %s3456, 1

</llo_original>
